<compile_context>
chip_gen: v5e
topology: v5e:2x2
jax: 0.10.0
libtpu: 0.0.40
codegen_flags: <defaults>
</compile_context>

<pallas_src>
import functools

import jax
import jax.numpy as jnp
from jax.experimental import pallas as pl
from jax.experimental.pallas import tpu as pltpu

EPS = 1e-5  # PyTorch nn.LayerNorm default eps
_VMEM_LIMIT = 48 * 1024 * 1024  # headroom under v7x's 64 MiB physical VMEM


# ----------------------------- small helpers -------------------------------

def _layernorm(x, g, b):
    mu = jnp.mean(x, axis=-1, keepdims=True)
    var = jnp.mean((x - mu) ** 2, axis=-1, keepdims=True)
    return (x - mu) * jax.lax.rsqrt(var + EPS) * g + b


def _gelu_exact(x):
    # nn.GELU(approximate='none'): 0.5*x*(1+erf(x/sqrt(2)))
    return 0.5 * x * (1.0 + jax.lax.erf(x * (2.0 ** -0.5)))


def _bf16(x):
    return x.astype(jnp.bfloat16)


def _choose_tn(n_tokens, batch, emb_dim, mlp_dim):
    """Token tile for the fused layer kernel: ~1024 rows/tile, VMEM-bounded."""
    target_rows = 1024
    vmem_budget = 16 * 1024 * 1024          # conservative across v5e/v6e/v7x
    bytes_per_tok = 4 * max(batch, 1) * (12 * emb_dim + mlp_dim)
    tn = min(max(1, target_rows // max(batch, 1)),
             max(1, vmem_budget // bytes_per_tok))
    if tn >= n_tokens:
        return n_tokens
    tn = (tn // 8) * 8                      # keep (8,128)-aligned blocks
    return n_tokens if tn < 8 else tn


# --------------------------------- kernels ---------------------------------

def patch_embed_kernel(x_ref, g1_ref, b1_ref, w_ref, bw_ref, g2_ref, b2_ref,
                       o_ref):
    # Rows of (patch_dim,): LayerNorm -> Linear (bf16 MXU, f32 acc) -> LayerNorm.
    h = _layernorm(x_ref[...], g1_ref[...], b1_ref[...])
    y = jnp.dot(_bf16(h), w_ref[...],
                preferred_element_type=jnp.float32) + bw_ref[...]
    o_ref[...] = _layernorm(y, g2_ref[...], b2_ref[...])


def transformer_layer_kernel(x_ref, lag_ref, lab_ref, wqkv_ref, bqkv_ref,
                             wo_ref, bo_ref, lfg_ref, lfb_ref,
                             w1_ref, b1_ref, w2_ref, b2_ref,
                             o_ref, qkv_s, *, batch, emb_dim, scale):
    """One full transformer layer on a (B, TN, D) token tile.

    x_ref/o_ref: (B, TN, D); qkv_s: VMEM scratch (B, TN, 3D).
    Attention is across the image-batch axis B, per token (matches the
    reference, which feeds (B, N, D) into MHA with batch_first=False).
    """
    D = emb_dim

    # Phase 1: PreNorm + folded q/k/v projection for every image-batch element.
    for b in range(batch):
        h = _layernorm(x_ref[b], lag_ref[...], lab_ref[...])
        qkv_s[b] = jnp.dot(_bf16(h), wqkv_ref[...],
                           preferred_element_type=jnp.float32) + bqkv_ref[...]

    # Phase 2: attention across B (per token), out_proj + residual,
    # PreNorm + FeedForward + residual.  The B x B score problem is tiny, so
    # it stays on the VPU; the MXU is reserved for the D-contracted matmuls.
    # TODO(synk): for large image batches route scores through a batched MXU
    # einsum instead of this unrolled VPU path.
    for b in range(batch):
        qb = qkv_s[b][:, 0:D] * scale
        scores, vals = [], []
        for c in range(batch):
            row_c = qkv_s[c]
            scores.append(jnp.sum(qb * row_c[:, D:2 * D], axis=-1,
                                  keepdims=True))
            vals.append(row_c[:, 2 * D:3 * D])
        m = scores[0]
        for c in range(1, batch):
            m = jnp.maximum(m, scores[c])
        exps = [jnp.exp(s - m) for s in scores]
        den = exps[0]
        for c in range(1, batch):
            den = den + exps[c]
        inv = pl.reciprocal(den, approx=True)
        ctx = (exps[0] * inv) * vals[0]
        for c in range(1, batch):
            ctx = ctx + (exps[c] * inv) * vals[c]

        a = jnp.dot(_bf16(ctx), wo_ref[...],
                    preferred_element_type=jnp.float32) + bo_ref[...]
        a = a + x_ref[b]                                   # residual 1
        h2 = _layernorm(a, lfg_ref[...], lfb_ref[...])
        f = jnp.dot(_bf16(h2), w1_ref[...],
                    preferred_element_type=jnp.float32) + b1_ref[...]
        f = _gelu_exact(f)
        f = jnp.dot(_bf16(f), w2_ref[...],
                    preferred_element_type=jnp.float32) + b2_ref[...]
        o_ref[b] = a + f                                   # residual 2


def pool_head_kernel(x_ref, w1_ref, b1_ref, w2_ref, b2_ref, o_ref, acc_ref,
                     *, batch, n_tokens, tn):
    # Mean over tokens (tiled, masked accumulation) -> Linear -> ReLU -> Linear.
    i = pl.program_id(0)

    @pl.when(i == 0)
    def _init():
        acc_ref[...] = jnp.zeros_like(acc_ref)

    valid = (jax.lax.broadcasted_iota(jnp.int32, (tn, 1), 0) + i * tn) < n_tokens
    for b in range(batch):
        part = jnp.sum(jnp.where(valid, x_ref[b], 0.0), axis=0, keepdims=True)
        acc_ref[b:b + 1, :] = acc_ref[b:b + 1, :] + part

    @pl.when(i == pl.num_programs(0) - 1)
    def _finish():
        mean = acc_ref[...] * (1.0 / n_tokens)
        h = jnp.dot(_bf16(mean), w1_ref[...],
                    preferred_element_type=jnp.float32) + b1_ref[...]
        h = jnp.maximum(h, 0.0)
        o_ref[...] = jnp.dot(_bf16(h), w2_ref[...],
                             preferred_element_type=jnp.float32) + b2_ref[...]


# ------------------------------ params / glue -------------------------------

def init_vit_params(key, *, in_channels, img_size, patch_size, emb_dim,
                    n_layers, mlp_dim, hidden_dim, out_dim):
    assert in_channels == 1, (
        "reference model is only well-defined for in_channels == 1")
    patch_dim = patch_size * patch_size * in_channels
    num_patches = (img_size // patch_size) ** 2
    keys = iter(jax.random.split(key, 8 + 16 * n_layers))

    def dense(fin, fout):
        w = jax.random.normal(next(keys), (fin, fout), jnp.float32) * (fin ** -0.5)
        b = jnp.zeros((1, fout), jnp.float32)
        return w, b

    def ln(dim):
        return jnp.ones((1, dim), jnp.float32), jnp.zeros((1, dim), jnp.float32)

    p = {}
    p['pe_ln1_g'], p['pe_ln1_b'] = ln(patch_size * patch_size)
    p['pe_w'], p['pe_b'] = dense(patch_dim, emb_dim)
    p['pe_ln2_g'], p['pe_ln2_b'] = ln(emb_dim)
    p['cls_token'] = jax.random.uniform(next(keys), (1, 1, emb_dim), jnp.float32)
    p['pos_embedding'] = jax.random.normal(
        next(keys), (in_channels, num_patches + 1, emb_dim), jnp.float32)

    layers = []
    for _ in range(n_layers):
        lyr = {}
        lyr['ln_a_g'], lyr['ln_a_b'] = ln(emb_dim)
        lyr['wq'], lyr['bq'] = dense(emb_dim, emb_dim)
        lyr['wk'], lyr['bk'] = dense(emb_dim, emb_dim)
        lyr['wv'], lyr['bv'] = dense(emb_dim, emb_dim)
        lyr['wqi'], lyr['bqi'] = dense(emb_dim, emb_dim)  # MHA in_proj (q)
        lyr['wki'], lyr['bki'] = dense(emb_dim, emb_dim)  # MHA in_proj (k)
        lyr['wvi'], lyr['bvi'] = dense(emb_dim, emb_dim)  # MHA in_proj (v)
        lyr['wo'], lyr['bo'] = dense(emb_dim, emb_dim)    # MHA out_proj
        lyr['ln_f_g'], lyr['ln_f_b'] = ln(emb_dim)
        lyr['w1'], lyr['b1'] = dense(emb_dim, mlp_dim)
        lyr['w2'], lyr['b2'] = dense(mlp_dim, emb_dim)
        layers.append(lyr)
    p['layers'] = layers
    p['h1_w'], p['h1_b'] = dense(emb_dim, hidden_dim)
    p['h2_w'], p['h2_b'] = dense(hidden_dim, out_dim)
    return p


def vit_forward(params, img, *, patch_size, n_heads):
    assert n_heads == 1  # TODO(synk): multi-head split; reference default is 1.
    B, C, H, W = img.shape
    assert C == 1
    ps = patch_size
    nh, nw = H // ps, W // ps
    P = nh * nw
    patch_dim = ps * ps * C
    D = params['pe_w'].shape[1]
    mlp = params['layers'][0]['w1'].shape[1]
    hidden = params['h1_w'].shape[1]
    out_dim = params['h2_w'].shape[1]
    scale = float(D) ** -0.5   # 1 head -> head_dim == D

    cparams_par = pltpu.CompilerParams(
        dimension_semantics=("parallel",), vmem_limit_bytes=_VMEM_LIMIT)
    cparams_arb = pltpu.CompilerParams(
        dimension_semantics=("arbitrary",), vmem_limit_bytes=_VMEM_LIMIT)

    # ---- patch embedding: rearrange (XLA) + fused LN->Linear->LN kernel ----
    x = img.astype(jnp.float32).reshape(B, C, nh, ps, nw, ps)
    x = jnp.transpose(x, (0, 2, 4, 3, 5, 1)).reshape(B * P, patch_dim)

    M0 = B * P
    tm = M0 if M0 <= 1024 else 1024
    tok = pl.pallas_call(
        patch_embed_kernel,
        out_shape=jax.ShapeDtypeStruct((M0, D), jnp.float32),
        grid=(pl.cdiv(M0, tm),),
        in_specs=[
            pl.BlockSpec((tm, patch_dim), lambda i: (i, 0)),
            pl.BlockSpec((1, patch_dim), lambda i: (0, 0)),
            pl.BlockSpec((1, patch_dim), lambda i: (0, 0)),
            pl.BlockSpec((patch_dim, D), lambda i: (0, 0)),
            pl.BlockSpec((1, D), lambda i: (0, 0)),
            pl.BlockSpec((1, D), lambda i: (0, 0)),
            pl.BlockSpec((1, D), lambda i: (0, 0)),
        ],
        out_specs=pl.BlockSpec((tm, D), lambda i: (i, 0)),
        compiler_params=cparams_par,
    )(x, params['pe_ln1_g'], params['pe_ln1_b'],
      _bf16(params['pe_w']), params['pe_b'],
      params['pe_ln2_g'], params['pe_ln2_b'])

    # cls token + positional embedding (one-time XLA glue on a (B, N, D) tensor)
    # TODO(synk): fold the cls concat + pos-add directly into the patch kernel.
    tok = tok.reshape(B, P, D)
    cls = jnp.broadcast_to(params['cls_token'].astype(jnp.float32), (B, 1, D))
    xt = jnp.concatenate([cls, tok], axis=1) + params['pos_embedding'].astype(jnp.float32)
    N = P + 1

    tn = _choose_tn(N, B, D, mlp)
    grid = (pl.cdiv(N, tn),)
    act_spec = pl.BlockSpec((B, tn, D), lambda i: (0, i, 0))

    def w_spec(shape):
        return pl.BlockSpec(shape, lambda i: (0, 0))

    # ----------------------- fused transformer layers -----------------------
    for lyr in params['layers']:
        # Fold Attention.q/k/v Linear followed by MHA in_proj into one (D, 3D)
        # effective projection (halves MXU work and weight DMA).
        w_q = lyr['wq'] @ lyr['wqi']
        w_k = lyr['wk'] @ lyr['wki']
        w_v = lyr['wv'] @ lyr['wvi']
        b_q = lyr['bq'] @ lyr['wqi'] + lyr['bqi']
        b_k = lyr['bk'] @ lyr['wki'] + lyr['bki']
        b_v = lyr['bv'] @ lyr['wvi'] + lyr['bvi']
        w_qkv = _bf16(jnp.concatenate([w_q, w_k, w_v], axis=1))
        b_qkv = jnp.concatenate([b_q, b_k, b_v], axis=1)

        xt = pl.pallas_call(
            functools.partial(transformer_layer_kernel,
                              batch=B, emb_dim=D, scale=scale),
            out_shape=jax.ShapeDtypeStruct((B, N, D), jnp.float32),
            grid=grid,
            in_specs=[
                act_spec,
                w_spec((1, D)), w_spec((1, D)),          # ln_a gamma/beta
                w_spec((D, 3 * D)), w_spec((1, 3 * D)),  # folded qkv
                w_spec((D, D)), w_spec((1, D)),          # MHA out_proj
                w_spec((1, D)), w_spec((1, D)),          # ln_f gamma/beta
                w_spec((D, mlp)), w_spec((1, mlp)),      # FF linear 1
                w_spec((mlp, D)), w_spec((1, D)),        # FF linear 2
            ],
            out_specs=act_spec,
            scratch_shapes=[pltpu.VMEM((B, tn, 3 * D), jnp.float32)],
            compiler_params=cparams_par,
        )(xt, lyr['ln_a_g'], lyr['ln_a_b'], w_qkv, b_qkv,
          _bf16(lyr['wo']), lyr['bo'], lyr['ln_f_g'], lyr['ln_f_b'],
          _bf16(lyr['w1']), lyr['b1'], _bf16(lyr['w2']), lyr['b2'])

    # ------------------------- mean pool + MLP head --------------------------
    out_pad = -(-out_dim // 128) * 128        # lane-dense classifier output
    h2_w = jnp.pad(params['h2_w'], ((0, 0), (0, out_pad - out_dim)))
    h2_b = jnp.pad(params['h2_b'], ((0, 0), (0, out_pad - out_dim)))
    pooled = pl.pallas_call(
        functools.partial(pool_head_kernel, batch=B, n_tokens=N, tn=tn),
        out_shape=jax.ShapeDtypeStruct((B, out_pad), jnp.float32),
        grid=grid,
        in_specs=[
            act_spec,
            pl.BlockSpec((D, hidden), lambda i: (0, 0)),
            pl.BlockSpec((1, hidden), lambda i: (0, 0)),
            pl.BlockSpec((hidden, out_pad), lambda i: (0, 0)),
            pl.BlockSpec((1, out_pad), lambda i: (0, 0)),
        ],
        out_specs=pl.BlockSpec((B, out_pad), lambda i: (0, 0)),
        scratch_shapes=[pltpu.VMEM((B, D), jnp.float32)],
        compiler_params=cparams_arb,
    )(xt, _bf16(params['h1_w']), params['h1_b'], _bf16(h2_w), h2_b)
    return pooled[:, :out_dim]


# ----------------------------------- main -----------------------------------

if __name__ == "__main__":
    # Small config consistent with the module (emb_dim=128 is the PyTorch
    # default and lane-dense).
    B, C, H, W = 2, 1, 16, 16
    patch_size = 8
    emb_dim = 128
    n_heads = 1
    n_layers = 2
    mlp_dim = 256
    hidden_dim = 256
    out_dim = 2

    key = jax.random.PRNGKey(0)
    pkey, xkey = jax.random.split(key)
    params = init_vit_params(pkey, in_channels=C, img_size=H,
                             patch_size=patch_size, emb_dim=emb_dim,
                             n_layers=n_layers, mlp_dim=mlp_dim,
                             hidden_dim=hidden_dim, out_dim=out_dim)
    img = jax.random.normal(xkey, (B, C, H, W), jnp.float32)

    fwd = jax.jit(functools.partial(vit_forward, patch_size=patch_size,
                                    n_heads=n_heads))
    out = fwd(params, img)
    jax.block_until_ready(out)
    assert out.shape == (B, out_dim), out.shape
    assert bool(jnp.all(jnp.isfinite(out)))
    print("KERNEL_OK")
</pallas_src>

<mosaic_0001>
module attributes {stable_mosaic.version = 11 : i64} {
  func.func @patch_embed_kernel(%arg0: i32, %arg1: memref<8x64xf32, #tpu.memory_space<vmem>>, %arg2: memref<1x64xf32, #tpu.memory_space<vmem>>, %arg3: memref<1x64xf32, #tpu.memory_space<vmem>>, %arg4: memref<64x128xbf16, #tpu.memory_space<vmem>>, %arg5: memref<1x128xf32, #tpu.memory_space<vmem>>, %arg6: memref<1x128xf32, #tpu.memory_space<vmem>>, %arg7: memref<1x128xf32, #tpu.memory_space<vmem>>, %arg8: memref<8x128xf32, #tpu.memory_space<vmem>>) attributes {dimension_semantics = [#tpu.dimension_semantics<parallel>], iteration_bounds = array<i64: 1>, scalar_prefetch = 0 : i64, scratch_operands = 0 : i64, tpu.core_type = #tpu.core_type<tc>, window_params = [{transform_indices = @transform_0, window_bounds = array<i64: 8, 64>}, {pipeline_mode = #tpu.pipeline_mode<synchronous>, transform_indices = @transform_1, window_bounds = array<i64: 1, 64>}, {pipeline_mode = #tpu.pipeline_mode<synchronous>, transform_indices = @transform_2, window_bounds = array<i64: 1, 64>}, {pipeline_mode = #tpu.pipeline_mode<synchronous>, transform_indices = @transform_3, window_bounds = array<i64: 64, 128>}, {pipeline_mode = #tpu.pipeline_mode<synchronous>, transform_indices = @transform_4, window_bounds = array<i64: 1, 128>}, {pipeline_mode = #tpu.pipeline_mode<synchronous>, transform_indices = @transform_5, window_bounds = array<i64: 1, 128>}, {pipeline_mode = #tpu.pipeline_mode<synchronous>, transform_indices = @transform_6, window_bounds = array<i64: 1, 128>}, {transform_indices = @transform_7, window_bounds = array<i64: 8, 128>}]} {
    %c0 = arith.constant 0 : index
    %c0_0 = arith.constant 0 : index
    %0 = vector.load %arg1[%c0, %c0_0] : memref<8x64xf32, #tpu.memory_space<vmem>>, vector<8x64xf32>
    %c0_1 = arith.constant 0 : index
    %c0_2 = arith.constant 0 : index
    %1 = vector.load %arg2[%c0_1, %c0_2] : memref<1x64xf32, #tpu.memory_space<vmem>>, vector<1x64xf32>
    %c0_3 = arith.constant 0 : index
    %c0_4 = arith.constant 0 : index
    %2 = vector.load %arg3[%c0_3, %c0_4] : memref<1x64xf32, #tpu.memory_space<vmem>>, vector<1x64xf32>
    %cst = arith.constant dense<0.000000e+00> : vector<8xf32>
    %3 = vector.multi_reduction <add>, %0, %cst [1] : vector<8x64xf32> to vector<8xf32>
    %4 = vector.shape_cast %3 : vector<8xf32> to vector<8x1xf32>
    %cst_5 = arith.constant 6.400000e+01 : f32
    %5 = vector.broadcast %cst_5 : f32 to vector<8x1xf32>
    %6 = arith.divf %4, %5 : vector<8x1xf32>
    %7 = vector.broadcast %6 : vector<8x1xf32> to vector<8x64xf32>
    %8 = arith.subf %0, %7 : vector<8x64xf32>
    %9 = arith.mulf %8, %8 : vector<8x64xf32>
    %cst_6 = arith.constant dense<0.000000e+00> : vector<8xf32>
    %10 = vector.multi_reduction <add>, %9, %cst_6 [1] : vector<8x64xf32> to vector<8xf32>
    %11 = vector.shape_cast %10 : vector<8xf32> to vector<8x1xf32>
    %cst_7 = arith.constant 6.400000e+01 : f32
    %12 = vector.broadcast %cst_7 : f32 to vector<8x1xf32>
    %13 = arith.divf %11, %12 : vector<8x1xf32>
    %14 = vector.broadcast %6 : vector<8x1xf32> to vector<8x64xf32>
    %15 = arith.subf %0, %14 : vector<8x64xf32>
    %cst_8 = arith.constant 9.99999974E-6 : f32
    %16 = vector.broadcast %cst_8 : f32 to vector<8x1xf32>
    %17 = arith.addf %13, %16 : vector<8x1xf32>
    %18 = math.rsqrt %17 : vector<8x1xf32>
    %19 = vector.broadcast %18 : vector<8x1xf32> to vector<8x64xf32>
    %20 = arith.mulf %15, %19 : vector<8x64xf32>
    %21 = vector.broadcast %1 : vector<1x64xf32> to vector<8x64xf32>
    %22 = arith.mulf %20, %21 : vector<8x64xf32>
    %23 = vector.broadcast %2 : vector<1x64xf32> to vector<8x64xf32>
    %24 = arith.addf %22, %23 : vector<8x64xf32>
    %25 = arith.truncf %24 : vector<8x64xf32> to vector<8x64xbf16>
    %c0_9 = arith.constant 0 : index
    %c0_10 = arith.constant 0 : index
    %26 = vector.load %arg4[%c0_9, %c0_10] : memref<64x128xbf16, #tpu.memory_space<vmem>>, vector<64x128xbf16>
    %cst_11 = arith.constant dense<0.000000e+00> : vector<8x128xf32>
    %27 = tpu.matmul %25, %26, %cst_11 {dimension_numbers = #tpu.dot_dimension_numbers<[1], [0], [0], [1], [0, 0, 1, 1], [], []>} : vector<8x64xbf16>, vector<64x128xbf16>, vector<8x128xf32> -> vector<8x128xf32>
    %c0_12 = arith.constant 0 : index
    %c0_13 = arith.constant 0 : index
    %28 = vector.load %arg5[%c0_12, %c0_13] : memref<1x128xf32, #tpu.memory_space<vmem>>, vector<1x128xf32>
    %29 = vector.broadcast %28 : vector<1x128xf32> to vector<8x128xf32>
    %30 = arith.addf %27, %29 : vector<8x128xf32>
    %c0_14 = arith.constant 0 : index
    %c0_15 = arith.constant 0 : index
    %31 = vector.load %arg6[%c0_14, %c0_15] : memref<1x128xf32, #tpu.memory_space<vmem>>, vector<1x128xf32>
    %c0_16 = arith.constant 0 : index
    %c0_17 = arith.constant 0 : index
    %32 = vector.load %arg7[%c0_16, %c0_17] : memref<1x128xf32, #tpu.memory_space<vmem>>, vector<1x128xf32>
    %cst_18 = arith.constant dense<0.000000e+00> : vector<8xf32>
    %33 = vector.multi_reduction <add>, %30, %cst_18 [1] : vector<8x128xf32> to vector<8xf32>
    %34 = vector.shape_cast %33 : vector<8xf32> to vector<8x1xf32>
    %cst_19 = arith.constant 1.280000e+02 : f32
    %35 = vector.broadcast %cst_19 : f32 to vector<8x1xf32>
    %36 = arith.divf %34, %35 : vector<8x1xf32>
    %37 = vector.broadcast %36 : vector<8x1xf32> to vector<8x128xf32>
    %38 = arith.subf %30, %37 : vector<8x128xf32>
    %39 = arith.mulf %38, %38 : vector<8x128xf32>
    %cst_20 = arith.constant dense<0.000000e+00> : vector<8xf32>
    %40 = vector.multi_reduction <add>, %39, %cst_20 [1] : vector<8x128xf32> to vector<8xf32>
    %41 = vector.shape_cast %40 : vector<8xf32> to vector<8x1xf32>
    %cst_21 = arith.constant 1.280000e+02 : f32
    %42 = vector.broadcast %cst_21 : f32 to vector<8x1xf32>
    %43 = arith.divf %41, %42 : vector<8x1xf32>
    %44 = vector.broadcast %36 : vector<8x1xf32> to vector<8x128xf32>
    %45 = arith.subf %30, %44 : vector<8x128xf32>
    %cst_22 = arith.constant 9.99999974E-6 : f32
    %46 = vector.broadcast %cst_22 : f32 to vector<8x1xf32>
    %47 = arith.addf %43, %46 : vector<8x1xf32>
    %48 = math.rsqrt %47 : vector<8x1xf32>
    %49 = vector.broadcast %48 : vector<8x1xf32> to vector<8x128xf32>
    %50 = arith.mulf %45, %49 : vector<8x128xf32>
    %51 = vector.broadcast %31 : vector<1x128xf32> to vector<8x128xf32>
    %52 = arith.mulf %50, %51 : vector<8x128xf32>
    %53 = vector.broadcast %32 : vector<1x128xf32> to vector<8x128xf32>
    %54 = arith.addf %52, %53 : vector<8x128xf32>
    %c0_23 = arith.constant 0 : index
    %c0_24 = arith.constant 0 : index
    %55 = vector.load %arg8[%c0_23, %c0_24] : memref<8x128xf32, #tpu.memory_space<vmem>>, vector<8x128xf32>
    tpu.vector_store %arg8[%c0_23, %c0_24], %54 {strides = array<i32>} : memref<8x128xf32, #tpu.memory_space<vmem>>, vector<8x128xf32>,
    return
  }
  func.func @transform_0(%arg0: i32) -> (i32, i32) {
    %c0_i32 = arith.constant 0 : i32
    %c0_i32_0 = arith.constant 0 : i32
    return %arg0, %c0_i32 : i32, i32
  }
  func.func @transform_1(%arg0: i32) -> (i32, i32) {
    %c0_i32 = arith.constant 0 : i32
    %c0_i32_0 = arith.constant 0 : i32
    %c0_i32_1 = arith.constant 0 : i32
    return %c0_i32, %c0_i32_0 : i32, i32
  }
  func.func @transform_2(%arg0: i32) -> (i32, i32) {
    %c0_i32 = arith.constant 0 : i32
    %c0_i32_0 = arith.constant 0 : i32
    %c0_i32_1 = arith.constant 0 : i32
    return %c0_i32, %c0_i32_0 : i32, i32
  }
  func.func @transform_3(%arg0: i32) -> (i32, i32) {
    %c0_i32 = arith.constant 0 : i32
    %c0_i32_0 = arith.constant 0 : i32
    %c0_i32_1 = arith.constant 0 : i32
    return %c0_i32, %c0_i32_0 : i32, i32
  }
  func.func @transform_4(%arg0: i32) -> (i32, i32) {
    %c0_i32 = arith.constant 0 : i32
    %c0_i32_0 = arith.constant 0 : i32
    %c0_i32_1 = arith.constant 0 : i32
    return %c0_i32, %c0_i32_0 : i32, i32
  }
  func.func @transform_5(%arg0: i32) -> (i32, i32) {
    %c0_i32 = arith.constant 0 : i32
    %c0_i32_0 = arith.constant 0 : i32
    %c0_i32_1 = arith.constant 0 : i32
    return %c0_i32, %c0_i32_0 : i32, i32
  }
  func.func @transform_6(%arg0: i32) -> (i32, i32) {
    %c0_i32 = arith.constant 0 : i32
    %c0_i32_0 = arith.constant 0 : i32
    %c0_i32_1 = arith.constant 0 : i32
    return %c0_i32, %c0_i32_0 : i32, i32
  }
  func.func @transform_7(%arg0: i32) -> (i32, i32) {
    %c0_i32 = arith.constant 0 : i32
    %c0_i32_0 = arith.constant 0 : i32
    return %arg0, %c0_i32 : i32, i32
  }
}

module attributes {stable_mosaic.version = 11 : i64} {
  func.func @transformer_layer_kernel(%arg0: i32, %arg1: memref<2x5x128xf32, #tpu.memory_space<vmem>>, %arg2: memref<1x128xf32, #tpu.memory_space<vmem>>, %arg3: memref<1x128xf32, #tpu.memory_space<vmem>>, %arg4: memref<128x384xbf16, #tpu.memory_space<vmem>>, %arg5: memref<1x384xf32, #tpu.memory_space<vmem>>, %arg6: memref<128x128xbf16, #tpu.memory_space<vmem>>, %arg7: memref<1x128xf32, #tpu.memory_space<vmem>>, %arg8: memref<1x128xf32, #tpu.memory_space<vmem>>, %arg9: memref<1x128xf32, #tpu.memory_space<vmem>>, %arg10: memref<128x256xbf16, #tpu.memory_space<vmem>>, %arg11: memref<1x256xf32, #tpu.memory_space<vmem>>, %arg12: memref<256x128xbf16, #tpu.memory_space<vmem>>, %arg13: memref<1x128xf32, #tpu.memory_space<vmem>>, %arg14: memref<2x5x128xf32, #tpu.memory_space<vmem>>, %arg15: memref<2x5x384xf32, #tpu.memory_space<vmem>>) attributes {dimension_semantics = [#tpu.dimension_semantics<parallel>], iteration_bounds = array<i64: 1>, scalar_prefetch = 0 : i64, scratch_operands = 1 : i64, tpu.core_type = #tpu.core_type<tc>, window_params = [{transform_indices = @transform_0, window_bounds = array<i64: 2, 5, 128>}, {pipeline_mode = #tpu.pipeline_mode<synchronous>, transform_indices = @transform_1, window_bounds = array<i64: 1, 128>}, {pipeline_mode = #tpu.pipeline_mode<synchronous>, transform_indices = @transform_2, window_bounds = array<i64: 1, 128>}, {pipeline_mode = #tpu.pipeline_mode<synchronous>, transform_indices = @transform_3, window_bounds = array<i64: 128, 384>}, {pipeline_mode = #tpu.pipeline_mode<synchronous>, transform_indices = @transform_4, window_bounds = array<i64: 1, 384>}, {pipeline_mode = #tpu.pipeline_mode<synchronous>, transform_indices = @transform_5, window_bounds = array<i64: 128, 128>}, {pipeline_mode = #tpu.pipeline_mode<synchronous>, transform_indices = @transform_6, window_bounds = array<i64: 1, 128>}, {pipeline_mode = #tpu.pipeline_mode<synchronous>, transform_indices = @transform_7, window_bounds = array<i64: 1, 128>}, {pipeline_mode = #tpu.pipeline_mode<synchronous>, transform_indices = @transform_8, window_bounds = array<i64: 1, 128>}, {pipeline_mode = #tpu.pipeline_mode<synchronous>, transform_indices = @transform_9, window_bounds = array<i64: 128, 256>}, {pipeline_mode = #tpu.pipeline_mode<synchronous>, transform_indices = @transform_10, window_bounds = array<i64: 1, 256>}, {pipeline_mode = #tpu.pipeline_mode<synchronous>, transform_indices = @transform_11, window_bounds = array<i64: 256, 128>}, {pipeline_mode = #tpu.pipeline_mode<synchronous>, transform_indices = @transform_12, window_bounds = array<i64: 1, 128>}, {transform_indices = @transform_13, window_bounds = array<i64: 2, 5, 128>}]} {
    %c0 = arith.constant 0 : index
    %c0_0 = arith.constant 0 : index
    %c0_1 = arith.constant 0 : index
    %0 = vector.load %arg1[%c0, %c0_0, %c0_1] : memref<2x5x128xf32, #tpu.memory_space<vmem>>, vector<1x5x128xf32>
    %1 = vector.shape_cast %0 : vector<1x5x128xf32> to vector<5x128xf32>
    %c0_2 = arith.constant 0 : index
    %c0_3 = arith.constant 0 : index
    %2 = vector.load %arg2[%c0_2, %c0_3] : memref<1x128xf32, #tpu.memory_space<vmem>>, vector<1x128xf32>
    %c0_4 = arith.constant 0 : index
    %c0_5 = arith.constant 0 : index
    %3 = vector.load %arg3[%c0_4, %c0_5] : memref<1x128xf32, #tpu.memory_space<vmem>>, vector<1x128xf32>
    %cst = arith.constant dense<0.000000e+00> : vector<5xf32>
    %4 = vector.multi_reduction <add>, %1, %cst [1] : vector<5x128xf32> to vector<5xf32>
    %5 = vector.shape_cast %4 : vector<5xf32> to vector<5x1xf32>
    %cst_6 = arith.constant 1.280000e+02 : f32
    %6 = vector.broadcast %cst_6 : f32 to vector<5x1xf32>
    %7 = arith.divf %5, %6 : vector<5x1xf32>
    %8 = vector.broadcast %7 : vector<5x1xf32> to vector<5x128xf32>
    %9 = arith.subf %1, %8 : vector<5x128xf32>
    %10 = arith.mulf %9, %9 : vector<5x128xf32>
    %cst_7 = arith.constant dense<0.000000e+00> : vector<5xf32>
    %11 = vector.multi_reduction <add>, %10, %cst_7 [1] : vector<5x128xf32> to vector<5xf32>
    %12 = vector.shape_cast %11 : vector<5xf32> to vector<5x1xf32>
    %cst_8 = arith.constant 1.280000e+02 : f32
    %13 = vector.broadcast %cst_8 : f32 to vector<5x1xf32>
    %14 = arith.divf %12, %13 : vector<5x1xf32>
    %15 = vector.broadcast %7 : vector<5x1xf32> to vector<5x128xf32>
    %16 = arith.subf %1, %15 : vector<5x128xf32>
    %cst_9 = arith.constant 9.99999974E-6 : f32
    %17 = vector.broadcast %cst_9 : f32 to vector<5x1xf32>
    %18 = arith.addf %14, %17 : vector<5x1xf32>
    %19 = math.rsqrt %18 : vector<5x1xf32>
    %20 = vector.broadcast %19 : vector<5x1xf32> to vector<5x128xf32>
    %21 = arith.mulf %16, %20 : vector<5x128xf32>
    %22 = vector.broadcast %2 : vector<1x128xf32> to vector<5x128xf32>
    %23 = arith.mulf %21, %22 : vector<5x128xf32>
    %24 = vector.broadcast %3 : vector<1x128xf32> to vector<5x128xf32>
    %25 = arith.addf %23, %24 : vector<5x128xf32>
    %26 = arith.truncf %25 : vector<5x128xf32> to vector<5x128xbf16>
    %c0_10 = arith.constant 0 : index
    %c0_11 = arith.constant 0 : index
    %27 = vector.load %arg4[%c0_10, %c0_11] : memref<128x384xbf16, #tpu.memory_space<vmem>>, vector<128x384xbf16>
    %cst_12 = arith.constant dense<0.000000e+00> : vector<5x384xf32>
    %28 = tpu.matmul %26, %27, %cst_12 {dimension_numbers = #tpu.dot_dimension_numbers<[1], [0], [0], [1], [0, 0, 1, 1], [], []>} : vector<5x128xbf16>, vector<128x384xbf16>, vector<5x384xf32> -> vector<5x384xf32>
    %c0_13 = arith.constant 0 : index
    %c0_14 = arith.constant 0 : index
    %29 = vector.load %arg5[%c0_13, %c0_14] : memref<1x384xf32, #tpu.memory_space<vmem>>, vector<1x384xf32>
    %30 = vector.broadcast %29 : vector<1x384xf32> to vector<5x384xf32>
    %31 = arith.addf %28, %30 : vector<5x384xf32>
    %c0_15 = arith.constant 0 : index
    %c0_16 = arith.constant 0 : index
    %c0_17 = arith.constant 0 : index
    %32 = vector.load %arg15[%c0_15, %c0_16, %c0_17] : memref<2x5x384xf32, #tpu.memory_space<vmem>>, vector<1x5x384xf32>
    %33 = vector.shape_cast %32 : vector<1x5x384xf32> to vector<5x384xf32>
    %34 = vector.shape_cast %31 : vector<5x384xf32> to vector<1x5x384xf32>
    tpu.vector_store %arg15[%c0_15, %c0_16, %c0_17], %34 {strides = array<i32>} : memref<2x5x384xf32, #tpu.memory_space<vmem>>, vector<1x5x384xf32>,
    %c1 = arith.constant 1 : index
    %c0_18 = arith.constant 0 : index
    %c0_19 = arith.constant 0 : index
    %35 = vector.load %arg1[%c1, %c0_18, %c0_19] : memref<2x5x128xf32, #tpu.memory_space<vmem>>, vector<1x5x128xf32>
    %36 = vector.shape_cast %35 : vector<1x5x128xf32> to vector<5x128xf32>
    %c0_20 = arith.constant 0 : index
    %c0_21 = arith.constant 0 : index
    %37 = vector.load %arg2[%c0_20, %c0_21] : memref<1x128xf32, #tpu.memory_space<vmem>>, vector<1x128xf32>
    %c0_22 = arith.constant 0 : index
    %c0_23 = arith.constant 0 : index
    %38 = vector.load %arg3[%c0_22, %c0_23] : memref<1x128xf32, #tpu.memory_space<vmem>>, vector<1x128xf32>
    %cst_24 = arith.constant dense<0.000000e+00> : vector<5xf32>
    %39 = vector.multi_reduction <add>, %36, %cst_24 [1] : vector<5x128xf32> to vector<5xf32>
    %40 = vector.shape_cast %39 : vector<5xf32> to vector<5x1xf32>
    %cst_25 = arith.constant 1.280000e+02 : f32
    %41 = vector.broadcast %cst_25 : f32 to vector<5x1xf32>
    %42 = arith.divf %40, %41 : vector<5x1xf32>
    %43 = vector.broadcast %42 : vector<5x1xf32> to vector<5x128xf32>
    %44 = arith.subf %36, %43 : vector<5x128xf32>
    %45 = arith.mulf %44, %44 : vector<5x128xf32>
    %cst_26 = arith.constant dense<0.000000e+00> : vector<5xf32>
    %46 = vector.multi_reduction <add>, %45, %cst_26 [1] : vector<5x128xf32> to vector<5xf32>
    %47 = vector.shape_cast %46 : vector<5xf32> to vector<5x1xf32>
    %cst_27 = arith.constant 1.280000e+02 : f32
    %48 = vector.broadcast %cst_27 : f32 to vector<5x1xf32>
    %49 = arith.divf %47, %48 : vector<5x1xf32>
    %50 = vector.broadcast %42 : vector<5x1xf32> to vector<5x128xf32>
    %51 = arith.subf %36, %50 : vector<5x128xf32>
    %cst_28 = arith.constant 9.99999974E-6 : f32
    %52 = vector.broadcast %cst_28 : f32 to vector<5x1xf32>
    %53 = arith.addf %49, %52 : vector<5x1xf32>
    %54 = math.rsqrt %53 : vector<5x1xf32>
    %55 = vector.broadcast %54 : vector<5x1xf32> to vector<5x128xf32>
    %56 = arith.mulf %51, %55 : vector<5x128xf32>
    %57 = vector.broadcast %37 : vector<1x128xf32> to vector<5x128xf32>
    %58 = arith.mulf %56, %57 : vector<5x128xf32>
    %59 = vector.broadcast %38 : vector<1x128xf32> to vector<5x128xf32>
    %60 = arith.addf %58, %59 : vector<5x128xf32>
    %61 = arith.truncf %60 : vector<5x128xf32> to vector<5x128xbf16>
    %c0_29 = arith.constant 0 : index
    %c0_30 = arith.constant 0 : index
    %62 = vector.load %arg4[%c0_29, %c0_30] : memref<128x384xbf16, #tpu.memory_space<vmem>>, vector<128x384xbf16>
    %cst_31 = arith.constant dense<0.000000e+00> : vector<5x384xf32>
    %63 = tpu.matmul %61, %62, %cst_31 {dimension_numbers = #tpu.dot_dimension_numbers<[1], [0], [0], [1], [0, 0, 1, 1], [], []>} : vector<5x128xbf16>, vector<128x384xbf16>, vector<5x384xf32> -> vector<5x384xf32>
    %c0_32 = arith.constant 0 : index
    %c0_33 = arith.constant 0 : index
    %64 = vector.load %arg5[%c0_32, %c0_33] : memref<1x384xf32, #tpu.memory_space<vmem>>, vector<1x384xf32>
    %65 = vector.broadcast %64 : vector<1x384xf32> to vector<5x384xf32>
    %66 = arith.addf %63, %65 : vector<5x384xf32>
    %c1_34 = arith.constant 1 : index
    %c0_35 = arith.constant 0 : index
    %c0_36 = arith.constant 0 : index
    %67 = vector.load %arg15[%c1_34, %c0_35, %c0_36] : memref<2x5x384xf32, #tpu.memory_space<vmem>>, vector<1x5x384xf32>
    %68 = vector.shape_cast %67 : vector<1x5x384xf32> to vector<5x384xf32>
    %69 = vector.shape_cast %66 : vector<5x384xf32> to vector<1x5x384xf32>
    tpu.vector_store %arg15[%c1_34, %c0_35, %c0_36], %69 {strides = array<i32>} : memref<2x5x384xf32, #tpu.memory_space<vmem>>, vector<1x5x384xf32>,
    %c0_37 = arith.constant 0 : index
    %c0_38 = arith.constant 0 : index
    %c0_39 = arith.constant 0 : index
    %70 = vector.load %arg15[%c0_37, %c0_38, %c0_39] : memref<2x5x384xf32, #tpu.memory_space<vmem>>, vector<1x5x384xf32>
    %71 = vector.shape_cast %70 : vector<1x5x384xf32> to vector<5x384xf32>
    %72 = vector.extract_strided_slice %71 {offsets = [0, 0], sizes = [5, 128], strides = [1, 1]} : vector<5x384xf32> to vector<5x128xf32>
    %cst_40 = arith.constant 0.0883883461 : f32
    %73 = vector.broadcast %cst_40 : f32 to vector<5x128xf32>
    %74 = arith.mulf %72, %73 : vector<5x128xf32>
    %c0_41 = arith.constant 0 : index
    %c0_42 = arith.constant 0 : index
    %c0_43 = arith.constant 0 : index
    %75 = vector.load %arg15[%c0_41, %c0_42, %c0_43] : memref<2x5x384xf32, #tpu.memory_space<vmem>>, vector<1x5x384xf32>
    %76 = vector.shape_cast %75 : vector<1x5x384xf32> to vector<5x384xf32>
    %77 = vector.extract_strided_slice %76 {offsets = [0, 128], sizes = [5, 128], strides = [1, 1]} : vector<5x384xf32> to vector<5x128xf32>
    %78 = arith.mulf %74, %77 : vector<5x128xf32>
    %cst_44 = arith.constant dense<0.000000e+00> : vector<5xf32>
    %79 = vector.multi_reduction <add>, %78, %cst_44 [1] : vector<5x128xf32> to vector<5xf32>
    %80 = vector.shape_cast %79 : vector<5xf32> to vector<5x1xf32>
    %81 = vector.extract_strided_slice %76 {offsets = [0, 256], sizes = [5, 128], strides = [1, 1]} : vector<5x384xf32> to vector<5x128xf32>
    %c1_45 = arith.constant 1 : index
    %c0_46 = arith.constant 0 : index
    %c0_47 = arith.constant 0 : index
    %82 = vector.load %arg15[%c1_45, %c0_46, %c0_47] : memref<2x5x384xf32, #tpu.memory_space<vmem>>, vector<1x5x384xf32>
    %83 = vector.shape_cast %82 : vector<1x5x384xf32> to vector<5x384xf32>
    %84 = vector.extract_strided_slice %83 {offsets = [0, 128], sizes = [5, 128], strides = [1, 1]} : vector<5x384xf32> to vector<5x128xf32>
    %85 = arith.mulf %74, %84 : vector<5x128xf32>
    %cst_48 = arith.constant dense<0.000000e+00> : vector<5xf32>
    %86 = vector.multi_reduction <add>, %85, %cst_48 [1] : vector<5x128xf32> to vector<5xf32>
    %87 = vector.shape_cast %86 : vector<5xf32> to vector<5x1xf32>
    %88 = vector.extract_strided_slice %83 {offsets = [0, 256], sizes = [5, 128], strides = [1, 1]} : vector<5x384xf32> to vector<5x128xf32>
    %89 = arith.maximumf %80, %87 : vector<5x1xf32>
    %90 = arith.subf %80, %89 : vector<5x1xf32>
    %91 = math.exp %90 : vector<5x1xf32>
    %92 = arith.subf %87, %89 : vector<5x1xf32>
    %93 = math.exp %92 : vector<5x1xf32>
    %94 = arith.addf %91, %93 : vector<5x1xf32>
    %95 = tpu.reciprocal %94 {approx = true} : vector<5x1xf32> -> vector<5x1xf32>
    %96 = arith.mulf %91, %95 : vector<5x1xf32>
    %97 = vector.broadcast %96 : vector<5x1xf32> to vector<5x128xf32>
    %98 = arith.mulf %97, %81 : vector<5x128xf32>
    %99 = arith.mulf %93, %95 : vector<5x1xf32>
    %100 = vector.broadcast %99 : vector<5x1xf32> to vector<5x128xf32>
    %101 = arith.mulf %100, %88 : vector<5x128xf32>
    %102 = arith.addf %98, %101 : vector<5x128xf32>
    %103 = arith.truncf %102 : vector<5x128xf32> to vector<5x128xbf16>
    %c0_49 = arith.constant 0 : index
    %c0_50 = arith.constant 0 : index
    %104 = vector.load %arg6[%c0_49, %c0_50] : memref<128x128xbf16, #tpu.memory_space<vmem>>, vector<128x128xbf16>
    %cst_51 = arith.constant dense<0.000000e+00> : vector<5x128xf32>
    %105 = tpu.matmul %103, %104, %cst_51 {dimension_numbers = #tpu.dot_dimension_numbers<[1], [0], [0], [1], [0, 0, 1, 1], [], []>} : vector<5x128xbf16>, vector<128x128xbf16>, vector<5x128xf32> -> vector<5x128xf32>
    %c0_52 = arith.constant 0 : index
    %c0_53 = arith.constant 0 : index
    %106 = vector.load %arg7[%c0_52, %c0_53] : memref<1x128xf32, #tpu.memory_space<vmem>>, vector<1x128xf32>
    %107 = vector.broadcast %106 : vector<1x128xf32> to vector<5x128xf32>
    %108 = arith.addf %105, %107 : vector<5x128xf32>
    %c0_54 = arith.constant 0 : index
    %c0_55 = arith.constant 0 : index
    %c0_56 = arith.constant 0 : index
    %109 = vector.load %arg1[%c0_54, %c0_55, %c0_56] : memref<2x5x128xf32, #tpu.memory_space<vmem>>, vector<1x5x128xf32>
    %110 = vector.shape_cast %109 : vector<1x5x128xf32> to vector<5x128xf32>
    %111 = arith.addf %108, %110 : vector<5x128xf32>
    %c0_57 = arith.constant 0 : index
    %c0_58 = arith.constant 0 : index
    %112 = vector.load %arg8[%c0_57, %c0_58] : memref<1x128xf32, #tpu.memory_space<vmem>>, vector<1x128xf32>
    %c0_59 = arith.constant 0 : index
    %c0_60 = arith.constant 0 : index
    %113 = vector.load %arg9[%c0_59, %c0_60] : memref<1x128xf32, #tpu.memory_space<vmem>>, vector<1x128xf32>
    %cst_61 = arith.constant dense<0.000000e+00> : vector<5xf32>
    %114 = vector.multi_reduction <add>, %111, %cst_61 [1] : vector<5x128xf32> to vector<5xf32>
    %115 = vector.shape_cast %114 : vector<5xf32> to vector<5x1xf32>
    %cst_62 = arith.constant 1.280000e+02 : f32
    %116 = vector.broadcast %cst_62 : f32 to vector<5x1xf32>
    %117 = arith.divf %115, %116 : vector<5x1xf32>
    %118 = vector.broadcast %117 : vector<5x1xf32> to vector<5x128xf32>
    %119 = arith.subf %111, %118 : vector<5x128xf32>
    %120 = arith.mulf %119, %119 : vector<5x128xf32>
    %cst_63 = arith.constant dense<0.000000e+00> : vector<5xf32>
    %121 = vector.multi_reduction <add>, %120, %cst_63 [1] : vector<5x128xf32> to vector<5xf32>
    %122 = vector.shape_cast %121 : vector<5xf32> to vector<5x1xf32>
    %cst_64 = arith.constant 1.280000e+02 : f32
    %123 = vector.broadcast %cst_64 : f32 to vector<5x1xf32>
    %124 = arith.divf %122, %123 : vector<5x1xf32>
    %125 = vector.broadcast %117 : vector<5x1xf32> to vector<5x128xf32>
    %126 = arith.subf %111, %125 : vector<5x128xf32>
    %cst_65 = arith.constant 9.99999974E-6 : f32
    %127 = vector.broadcast %cst_65 : f32 to vector<5x1xf32>
    %128 = arith.addf %124, %127 : vector<5x1xf32>
    %129 = math.rsqrt %128 : vector<5x1xf32>
    %130 = vector.broadcast %129 : vector<5x1xf32> to vector<5x128xf32>
    %131 = arith.mulf %126, %130 : vector<5x128xf32>
    %132 = vector.broadcast %112 : vector<1x128xf32> to vector<5x128xf32>
    %133 = arith.mulf %131, %132 : vector<5x128xf32>
    %134 = vector.broadcast %113 : vector<1x128xf32> to vector<5x128xf32>
    %135 = arith.addf %133, %134 : vector<5x128xf32>
    %136 = arith.truncf %135 : vector<5x128xf32> to vector<5x128xbf16>
    %c0_66 = arith.constant 0 : index
    %c0_67 = arith.constant 0 : index
    %137 = vector.load %arg10[%c0_66, %c0_67] : memref<128x256xbf16, #tpu.memory_space<vmem>>, vector<128x256xbf16>
    %cst_68 = arith.constant dense<0.000000e+00> : vector<5x256xf32>
    %138 = tpu.matmul %136, %137, %cst_68 {dimension_numbers = #tpu.dot_dimension_numbers<[1], [0], [0], [1], [0, 0, 1, 1], [], []>} : vector<5x128xbf16>, vector<128x256xbf16>, vector<5x256xf32> -> vector<5x256xf32>
    %c0_69 = arith.constant 0 : index
    %c0_70 = arith.constant 0 : index
    %139 = vector.load %arg11[%c0_69, %c0_70] : memref<1x256xf32, #tpu.memory_space<vmem>>, vector<1x256xf32>
    %140 = vector.broadcast %139 : vector<1x256xf32> to vector<5x256xf32>
    %141 = arith.addf %138, %140 : vector<5x256xf32>
    %cst_71 = arith.constant 5.000000e-01 : f32
    %142 = vector.broadcast %cst_71 : f32 to vector<5x256xf32>
    %143 = arith.mulf %142, %141 : vector<5x256xf32>
    %cst_72 = arith.constant 0.707106769 : f32
    %144 = vector.broadcast %cst_72 : f32 to vector<5x256xf32>
    %145 = arith.mulf %141, %144 : vector<5x256xf32>
    %146 = math.erf %145 : vector<5x256xf32>
    %cst_73 = arith.constant 1.000000e+00 : f32
    %147 = vector.broadcast %cst_73 : f32 to vector<5x256xf32>
    %148 = arith.addf %147, %146 : vector<5x256xf32>
    %149 = arith.mulf %143, %148 : vector<5x256xf32>
    %150 = arith.truncf %149 : vector<5x256xf32> to vector<5x256xbf16>
    %c0_74 = arith.constant 0 : index
    %c0_75 = arith.constant 0 : index
    %151 = vector.load %arg12[%c0_74, %c0_75] : memref<256x128xbf16, #tpu.memory_space<vmem>>, vector<256x128xbf16>
    %cst_76 = arith.constant dense<0.000000e+00> : vector<5x128xf32>
    %152 = tpu.matmul %150, %151, %cst_76 {dimension_numbers = #tpu.dot_dimension_numbers<[1], [0], [0], [1], [0, 0, 1, 1], [], []>} : vector<5x256xbf16>, vector<256x128xbf16>, vector<5x128xf32> -> vector<5x128xf32>
    %c0_77 = arith.constant 0 : index
    %c0_78 = arith.constant 0 : index
    %153 = vector.load %arg13[%c0_77, %c0_78] : memref<1x128xf32, #tpu.memory_space<vmem>>, vector<1x128xf32>
    %154 = vector.broadcast %153 : vector<1x128xf32> to vector<5x128xf32>
    %155 = arith.addf %152, %154 : vector<5x128xf32>
    %156 = arith.addf %111, %155 : vector<5x128xf32>
    %c0_79 = arith.constant 0 : index
    %c0_80 = arith.constant 0 : index
    %c0_81 = arith.constant 0 : index
    %157 = vector.load %arg14[%c0_79, %c0_80, %c0_81] : memref<2x5x128xf32, #tpu.memory_space<vmem>>, vector<1x5x128xf32>
    %158 = vector.shape_cast %157 : vector<1x5x128xf32> to vector<5x128xf32>
    %159 = vector.shape_cast %156 : vector<5x128xf32> to vector<1x5x128xf32>
    tpu.vector_store %arg14[%c0_79, %c0_80, %c0_81], %159 {strides = array<i32>} : memref<2x5x128xf32, #tpu.memory_space<vmem>>, vector<1x5x128xf32>,
    %c1_82 = arith.constant 1 : index
    %c0_83 = arith.constant 0 : index
    %c0_84 = arith.constant 0 : index
    %160 = vector.load %arg15[%c1_82, %c0_83, %c0_84] : memref<2x5x384xf32, #tpu.memory_space<vmem>>, vector<1x5x384xf32>
    %161 = vector.shape_cast %160 : vector<1x5x384xf32> to vector<5x384xf32>
    %162 = vector.extract_strided_slice %161 {offsets = [0, 0], sizes = [5, 128], strides = [1, 1]} : vector<5x384xf32> to vector<5x128xf32>
    %cst_85 = arith.constant 0.0883883461 : f32
    %163 = vector.broadcast %cst_85 : f32 to vector<5x128xf32>
    %164 = arith.mulf %162, %163 : vector<5x128xf32>
    %c0_86 = arith.constant 0 : index
    %c0_87 = arith.constant 0 : index
    %c0_88 = arith.constant 0 : index
    %165 = vector.load %arg15[%c0_86, %c0_87, %c0_88] : memref<2x5x384xf32, #tpu.memory_space<vmem>>, vector<1x5x384xf32>
    %166 = vector.shape_cast %165 : vector<1x5x384xf32> to vector<5x384xf32>
    %167 = vector.extract_strided_slice %166 {offsets = [0, 128], sizes = [5, 128], strides = [1, 1]} : vector<5x384xf32> to vector<5x128xf32>
    %168 = arith.mulf %164, %167 : vector<5x128xf32>
    %cst_89 = arith.constant dense<0.000000e+00> : vector<5xf32>
    %169 = vector.multi_reduction <add>, %168, %cst_89 [1] : vector<5x128xf32> to vector<5xf32>
    %170 = vector.shape_cast %169 : vector<5xf32> to vector<5x1xf32>
    %171 = vector.extract_strided_slice %166 {offsets = [0, 256], sizes = [5, 128], strides = [1, 1]} : vector<5x384xf32> to vector<5x128xf32>
    %c1_90 = arith.constant 1 : index
    %c0_91 = arith.constant 0 : index
    %c0_92 = arith.constant 0 : index
    %172 = vector.load %arg15[%c1_90, %c0_91, %c0_92] : memref<2x5x384xf32, #tpu.memory_space<vmem>>, vector<1x5x384xf32>
    %173 = vector.shape_cast %172 : vector<1x5x384xf32> to vector<5x384xf32>
    %174 = vector.extract_strided_slice %173 {offsets = [0, 128], sizes = [5, 128], strides = [1, 1]} : vector<5x384xf32> to vector<5x128xf32>
    %175 = arith.mulf %164, %174 : vector<5x128xf32>
    %cst_93 = arith.constant dense<0.000000e+00> : vector<5xf32>
    %176 = vector.multi_reduction <add>, %175, %cst_93 [1] : vector<5x128xf32> to vector<5xf32>
    %177 = vector.shape_cast %176 : vector<5xf32> to vector<5x1xf32>
    %178 = vector.extract_strided_slice %173 {offsets = [0, 256], sizes = [5, 128], strides = [1, 1]} : vector<5x384xf32> to vector<5x128xf32>
    %179 = arith.maximumf %170, %177 : vector<5x1xf32>
    %180 = arith.subf %170, %179 : vector<5x1xf32>
    %181 = math.exp %180 : vector<5x1xf32>
    %182 = arith.subf %177, %179 : vector<5x1xf32>
    %183 = math.exp %182 : vector<5x1xf32>
    %184 = arith.addf %181, %183 : vector<5x1xf32>
    %185 = tpu.reciprocal %184 {approx = true} : vector<5x1xf32> -> vector<5x1xf32>
    %186 = arith.mulf %181, %185 : vector<5x1xf32>
    %187 = vector.broadcast %186 : vector<5x1xf32> to vector<5x128xf32>
    %188 = arith.mulf %187, %171 : vector<5x128xf32>
    %189 = arith.mulf %183, %185 : vector<5x1xf32>
    %190 = vector.broadcast %189 : vector<5x1xf32> to vector<5x128xf32>
    %191 = arith.mulf %190, %178 : vector<5x128xf32>
    %192 = arith.addf %188, %191 : vector<5x128xf32>
    %193 = arith.truncf %192 : vector<5x128xf32> to vector<5x128xbf16>
    %c0_94 = arith.constant 0 : index
    %c0_95 = arith.constant 0 : index
    %194 = vector.load %arg6[%c0_94, %c0_95] : memref<128x128xbf16, #tpu.memory_space<vmem>>, vector<128x128xbf16>
    %cst_96 = arith.constant dense<0.000000e+00> : vector<5x128xf32>
    %195 = tpu.matmul %193, %194, %cst_96 {dimension_numbers = #tpu.dot_dimension_numbers<[1], [0], [0], [1], [0, 0, 1, 1], [], []>} : vector<5x128xbf16>, vector<128x128xbf16>, vector<5x128xf32> -> vector<5x128xf32>
    %c0_97 = arith.constant 0 : index
    %c0_98 = arith.constant 0 : index
    %196 = vector.load %arg7[%c0_97, %c0_98] : memref<1x128xf32, #tpu.memory_space<vmem>>, vector<1x128xf32>
    %197 = vector.broadcast %196 : vector<1x128xf32> to vector<5x128xf32>
    %198 = arith.addf %195, %197 : vector<5x128xf32>
    %c1_99 = arith.constant 1 : index
    %c0_100 = arith.constant 0 : index
    %c0_101 = arith.constant 0 : index
    %199 = vector.load %arg1[%c1_99, %c0_100, %c0_101] : memref<2x5x128xf32, #tpu.memory_space<vmem>>, vector<1x5x128xf32>
    %200 = vector.shape_cast %199 : vector<1x5x128xf32> to vector<5x128xf32>
    %201 = arith.addf %198, %200 : vector<5x128xf32>
    %c0_102 = arith.constant 0 : index
    %c0_103 = arith.constant 0 : index
    %202 = vector.load %arg8[%c0_102, %c0_103] : memref<1x128xf32, #tpu.memory_space<vmem>>, vector<1x128xf32>
    %c0_104 = arith.constant 0 : index
    %c0_105 = arith.constant 0 : index
    %203 = vector.load %arg9[%c0_104, %c0_105] : memref<1x128xf32, #tpu.memory_space<vmem>>, vector<1x128xf32>
    %cst_106 = arith.constant dense<0.000000e+00> : vector<5xf32>
    %204 = vector.multi_reduction <add>, %201, %cst_106 [1] : vector<5x128xf32> to vector<5xf32>
    %205 = vector.shape_cast %204 : vector<5xf32> to vector<5x1xf32>
    %cst_107 = arith.constant 1.280000e+02 : f32
    %206 = vector.broadcast %cst_107 : f32 to vector<5x1xf32>
    %207 = arith.divf %205, %206 : vector<5x1xf32>
    %208 = vector.broadcast %207 : vector<5x1xf32> to vector<5x128xf32>
    %209 = arith.subf %201, %208 : vector<5x128xf32>
    %210 = arith.mulf %209, %209 : vector<5x128xf32>
    %cst_108 = arith.constant dense<0.000000e+00> : vector<5xf32>
    %211 = vector.multi_reduction <add>, %210, %cst_108 [1] : vector<5x128xf32> to vector<5xf32>
    %212 = vector.shape_cast %211 : vector<5xf32> to vector<5x1xf32>
    %cst_109 = arith.constant 1.280000e+02 : f32
    %213 = vector.broadcast %cst_109 : f32 to vector<5x1xf32>
    %214 = arith.divf %212, %213 : vector<5x1xf32>
    %215 = vector.broadcast %207 : vector<5x1xf32> to vector<5x128xf32>
    %216 = arith.subf %201, %215 : vector<5x128xf32>
    %cst_110 = arith.constant 9.99999974E-6 : f32
    %217 = vector.broadcast %cst_110 : f32 to vector<5x1xf32>
    %218 = arith.addf %214, %217 : vector<5x1xf32>
    %219 = math.rsqrt %218 : vector<5x1xf32>
    %220 = vector.broadcast %219 : vector<5x1xf32> to vector<5x128xf32>
    %221 = arith.mulf %216, %220 : vector<5x128xf32>
    %222 = vector.broadcast %202 : vector<1x128xf32> to vector<5x128xf32>
    %223 = arith.mulf %221, %222 : vector<5x128xf32>
    %224 = vector.broadcast %203 : vector<1x128xf32> to vector<5x128xf32>
    %225 = arith.addf %223, %224 : vector<5x128xf32>
    %226 = arith.truncf %225 : vector<5x128xf32> to vector<5x128xbf16>
    %c0_111 = arith.constant 0 : index
    %c0_112 = arith.constant 0 : index
    %227 = vector.load %arg10[%c0_111, %c0_112] : memref<128x256xbf16, #tpu.memory_space<vmem>>, vector<128x256xbf16>
    %cst_113 = arith.constant dense<0.000000e+00> : vector<5x256xf32>
    %228 = tpu.matmul %226, %227, %cst_113 {dimension_numbers = #tpu.dot_dimension_numbers<[1], [0], [0], [1], [0, 0, 1, 1], [], []>} : vector<5x128xbf16>, vector<128x256xbf16>, vector<5x256xf32> -> vector<5x256xf32>
    %c0_114 = arith.constant 0 : index
    %c0_115 = arith.constant 0 : index
    %229 = vector.load %arg11[%c0_114, %c0_115] : memref<1x256xf32, #tpu.memory_space<vmem>>, vector<1x256xf32>
    %230 = vector.broadcast %229 : vector<1x256xf32> to vector<5x256xf32>
    %231 = arith.addf %228, %230 : vector<5x256xf32>
    %cst_116 = arith.constant 5.000000e-01 : f32
    %232 = vector.broadcast %cst_116 : f32 to vector<5x256xf32>
    %233 = arith.mulf %232, %231 : vector<5x256xf32>
    %cst_117 = arith.constant 0.707106769 : f32
    %234 = vector.broadcast %cst_117 : f32 to vector<5x256xf32>
    %235 = arith.mulf %231, %234 : vector<5x256xf32>
    %236 = math.erf %235 : vector<5x256xf32>
    %cst_118 = arith.constant 1.000000e+00 : f32
    %237 = vector.broadcast %cst_118 : f32 to vector<5x256xf32>
    %238 = arith.addf %237, %236 : vector<5x256xf32>
    %239 = arith.mulf %233, %238 : vector<5x256xf32>
    %240 = arith.truncf %239 : vector<5x256xf32> to vector<5x256xbf16>
    %c0_119 = arith.constant 0 : index
    %c0_120 = arith.constant 0 : index
    %241 = vector.load %arg12[%c0_119, %c0_120] : memref<256x128xbf16, #tpu.memory_space<vmem>>, vector<256x128xbf16>
    %cst_121 = arith.constant dense<0.000000e+00> : vector<5x128xf32>
    %242 = tpu.matmul %240, %241, %cst_121 {dimension_numbers = #tpu.dot_dimension_numbers<[1], [0], [0], [1], [0, 0, 1, 1], [], []>} : vector<5x256xbf16>, vector<256x128xbf16>, vector<5x128xf32> -> vector<5x128xf32>
    %c0_122 = arith.constant 0 : index
    %c0_123 = arith.constant 0 : index
    %243 = vector.load %arg13[%c0_122, %c0_123] : memref<1x128xf32, #tpu.memory_space<vmem>>, vector<1x128xf32>
    %244 = vector.broadcast %243 : vector<1x128xf32> to vector<5x128xf32>
    %245 = arith.addf %242, %244 : vector<5x128xf32>
    %246 = arith.addf %201, %245 : vector<5x128xf32>
    %c1_124 = arith.constant 1 : index
    %c0_125 = arith.constant 0 : index
    %c0_126 = arith.constant 0 : index
    %247 = vector.load %arg14[%c1_124, %c0_125, %c0_126] : memref<2x5x128xf32, #tpu.memory_space<vmem>>, vector<1x5x128xf32>
    %248 = vector.shape_cast %247 : vector<1x5x128xf32> to vector<5x128xf32>
    %249 = vector.shape_cast %246 : vector<5x128xf32> to vector<1x5x128xf32>
    tpu.vector_store %arg14[%c1_124, %c0_125, %c0_126], %249 {strides = array<i32>} : memref<2x5x128xf32, #tpu.memory_space<vmem>>, vector<1x5x128xf32>,
    return
  }
  func.func @transform_0(%arg0: i32) -> (i32, i32, i32) {
    %c0_i32 = arith.constant 0 : i32
    %c0_i32_0 = arith.constant 0 : i32
    %c0_i32_1 = arith.constant 0 : i32
    return %c0_i32, %arg0, %c0_i32_0 : i32, i32, i32
  }
  func.func @transform_1(%arg0: i32) -> (i32, i32) {
    %c0_i32 = arith.constant 0 : i32
    %c0_i32_0 = arith.constant 0 : i32
    %c0_i32_1 = arith.constant 0 : i32
    return %c0_i32, %c0_i32_0 : i32, i32
  }
  func.func @transform_2(%arg0: i32) -> (i32, i32) {
    %c0_i32 = arith.constant 0 : i32
    %c0_i32_0 = arith.constant 0 : i32
    %c0_i32_1 = arith.constant 0 : i32
    return %c0_i32, %c0_i32_0 : i32, i32
  }
  func.func @transform_3(%arg0: i32) -> (i32, i32) {
    %c0_i32 = arith.constant 0 : i32
    %c0_i32_0 = arith.constant 0 : i32
    %c0_i32_1 = arith.constant 0 : i32
    return %c0_i32, %c0_i32_0 : i32, i32
  }
  func.func @transform_4(%arg0: i32) -> (i32, i32) {
    %c0_i32 = arith.constant 0 : i32
    %c0_i32_0 = arith.constant 0 : i32
    %c0_i32_1 = arith.constant 0 : i32
    return %c0_i32, %c0_i32_0 : i32, i32
  }
  func.func @transform_5(%arg0: i32) -> (i32, i32) {
    %c0_i32 = arith.constant 0 : i32
    %c0_i32_0 = arith.constant 0 : i32
    %c0_i32_1 = arith.constant 0 : i32
    return %c0_i32, %c0_i32_0 : i32, i32
  }
  func.func @transform_6(%arg0: i32) -> (i32, i32) {
    %c0_i32 = arith.constant 0 : i32
    %c0_i32_0 = arith.constant 0 : i32
    %c0_i32_1 = arith.constant 0 : i32
    return %c0_i32, %c0_i32_0 : i32, i32
  }
  func.func @transform_7(%arg0: i32) -> (i32, i32) {
    %c0_i32 = arith.constant 0 : i32
    %c0_i32_0 = arith.constant 0 : i32
    %c0_i32_1 = arith.constant 0 : i32
    return %c0_i32, %c0_i32_0 : i32, i32
  }
  func.func @transform_8(%arg0: i32) -> (i32, i32) {
    %c0_i32 = arith.constant 0 : i32
    %c0_i32_0 = arith.constant 0 : i32
    %c0_i32_1 = arith.constant 0 : i32
    return %c0_i32, %c0_i32_0 : i32, i32
  }
  func.func @transform_9(%arg0: i32) -> (i32, i32) {
    %c0_i32 = arith.constant 0 : i32
    %c0_i32_0 = arith.constant 0 : i32
    %c0_i32_1 = arith.constant 0 : i32
    return %c0_i32, %c0_i32_0 : i32, i32
  }
  func.func @transform_10(%arg0: i32) -> (i32, i32) {
    %c0_i32 = arith.constant 0 : i32
    %c0_i32_0 = arith.constant 0 : i32
    %c0_i32_1 = arith.constant 0 : i32
    return %c0_i32, %c0_i32_0 : i32, i32
  }
  func.func @transform_11(%arg0: i32) -> (i32, i32) {
    %c0_i32 = arith.constant 0 : i32
    %c0_i32_0 = arith.constant 0 : i32
    %c0_i32_1 = arith.constant 0 : i32
    return %c0_i32, %c0_i32_0 : i32, i32
  }
  func.func @transform_12(%arg0: i32) -> (i32, i32) {
    %c0_i32 = arith.constant 0 : i32
    %c0_i32_0 = arith.constant 0 : i32
    %c0_i32_1 = arith.constant 0 : i32
    return %c0_i32, %c0_i32_0 : i32, i32
  }
  func.func @transform_13(%arg0: i32) -> (i32, i32, i32) {
    %c0_i32 = arith.constant 0 : i32
    %c0_i32_0 = arith.constant 0 : i32
    %c0_i32_1 = arith.constant 0 : i32
    return %c0_i32, %arg0, %c0_i32_0 : i32, i32, i32
  }
}

module attributes {stable_mosaic.version = 11 : i64} {
  func.func @pool_head_kernel(%arg0: i32, %arg1: memref<2x5x128xf32, #tpu.memory_space<vmem>>, %arg2: memref<128x256xbf16, #tpu.memory_space<vmem>>, %arg3: memref<1x256xf32, #tpu.memory_space<vmem>>, %arg4: memref<256x128xbf16, #tpu.memory_space<vmem>>, %arg5: memref<1x128xf32, #tpu.memory_space<vmem>>, %arg6: memref<2x128xf32, #tpu.memory_space<vmem>>, %arg7: memref<2x128xf32, #tpu.memory_space<vmem>>) attributes {dimension_semantics = [#tpu.dimension_semantics<arbitrary>], iteration_bounds = array<i64: 1>, scalar_prefetch = 0 : i64, scratch_operands = 1 : i64, tpu.core_type = #tpu.core_type<tc>, window_params = [{transform_indices = @transform_0, window_bounds = array<i64: 2, 5, 128>}, {pipeline_mode = #tpu.pipeline_mode<synchronous>, transform_indices = @transform_1, window_bounds = array<i64: 128, 256>}, {pipeline_mode = #tpu.pipeline_mode<synchronous>, transform_indices = @transform_2, window_bounds = array<i64: 1, 256>}, {pipeline_mode = #tpu.pipeline_mode<synchronous>, transform_indices = @transform_3, window_bounds = array<i64: 256, 128>}, {pipeline_mode = #tpu.pipeline_mode<synchronous>, transform_indices = @transform_4, window_bounds = array<i64: 1, 128>}, {pipeline_mode = #tpu.pipeline_mode<synchronous>, transform_indices = @transform_5, window_bounds = array<i64: 2, 128>}]} {
    %c0_i32 = arith.constant 0 : i32
    %0 = arith.cmpi eq, %arg0, %c0_i32 : i32
    %1 = arith.extui %0 : i1 to i32
    %c0_i32_0 = arith.constant 0 : i32
    %2 = arith.cmpi ne, %1, %c0_i32_0 : i32
    scf.if %2 {
      %cst_19 = arith.constant 0.000000e+00 : f32
      %34 = vector.broadcast %cst_19 : f32 to vector<2x128xf32>
      %c0_20 = arith.constant 0 : index
      %c0_21 = arith.constant 0 : index
      %35 = vector.load %arg7[%c0_20, %c0_21] : memref<2x128xf32, #tpu.memory_space<vmem>>, vector<2x128xf32>
      tpu.vector_store %arg7[%c0_20, %c0_21], %34 {strides = array<i32>} : memref<2x128xf32, #tpu.memory_space<vmem>>, vector<2x128xf32>,
    } else {
    }
    %3 = tpu.iota {dimensions = array<i32: 0>} : vector<5x1xi32>
    %c5_i32 = arith.constant 5 : i32
    %4 = arith.muli %arg0, %c5_i32 : i32
    %5 = vector.broadcast %4 : i32 to vector<5x1xi32>
    %6 = arith.addi %3, %5 : vector<5x1xi32>
    %c5_i32_1 = arith.constant 5 : i32
    %7 = vector.broadcast %c5_i32_1 : i32 to vector<5x1xi32>
    %8 = arith.cmpi slt, %6, %7 : vector<5x1xi32>
    %c0 = arith.constant 0 : index
    %c0_2 = arith.constant 0 : index
    %c0_3 = arith.constant 0 : index
    %9 = vector.load %arg1[%c0, %c0_2, %c0_3] : memref<2x5x128xf32, #tpu.memory_space<vmem>>, vector<1x5x128xf32>
    %10 = vector.shape_cast %9 : vector<1x5x128xf32> to vector<5x128xf32>
    %cst = arith.constant 0.000000e+00 : f32
    %11 = vector.shape_cast %8 : vector<5x1xi1> to vector<5x1xi1>
    %12 = vector.broadcast %11 : vector<5x1xi1> to vector<5x128xi1>
    %13 = vector.broadcast %cst : f32 to vector<5x128xf32>
    %14 = arith.select %12, %10, %13 : vector<5x128xi1>, vector<5x128xf32>
    %cst_4 = arith.constant dense<0.000000e+00> : vector<128xf32>
    %15 = vector.multi_reduction <add>, %14, %cst_4 [0] : vector<5x128xf32> to vector<128xf32>
    %16 = vector.shape_cast %15 : vector<128xf32> to vector<1x128xf32>
    %c0_5 = arith.constant 0 : index
    %c0_6 = arith.constant 0 : index
    %17 = vector.load %arg7[%c0_5, %c0_6] : memref<2x128xf32, #tpu.memory_space<vmem>>, vector<1x128xf32>
    %18 = arith.addf %17, %16 : vector<1x128xf32>
    %c0_7 = arith.constant 0 : index
    %c0_8 = arith.constant 0 : index
    %19 = vector.load %arg7[%c0_7, %c0_8] : memref<2x128xf32, #tpu.memory_space<vmem>>, vector<1x128xf32>
    tpu.vector_store %arg7[%c0_7, %c0_8], %18 {strides = array<i32>} : memref<2x128xf32, #tpu.memory_space<vmem>>, vector<1x128xf32>,
    %c1 = arith.constant 1 : index
    %c0_9 = arith.constant 0 : index
    %c0_10 = arith.constant 0 : index
    %20 = vector.load %arg1[%c1, %c0_9, %c0_10] : memref<2x5x128xf32, #tpu.memory_space<vmem>>, vector<1x5x128xf32>
    %21 = vector.shape_cast %20 : vector<1x5x128xf32> to vector<5x128xf32>
    %cst_11 = arith.constant 0.000000e+00 : f32
    %22 = vector.shape_cast %8 : vector<5x1xi1> to vector<5x1xi1>
    %23 = vector.broadcast %22 : vector<5x1xi1> to vector<5x128xi1>
    %24 = vector.broadcast %cst_11 : f32 to vector<5x128xf32>
    %25 = arith.select %23, %21, %24 : vector<5x128xi1>, vector<5x128xf32>
    %cst_12 = arith.constant dense<0.000000e+00> : vector<128xf32>
    %26 = vector.multi_reduction <add>, %25, %cst_12 [0] : vector<5x128xf32> to vector<128xf32>
    %27 = vector.shape_cast %26 : vector<128xf32> to vector<1x128xf32>
    %c1_13 = arith.constant 1 : index
    %c0_14 = arith.constant 0 : index
    %28 = vector.load %arg7[%c1_13, %c0_14] : memref<2x128xf32, #tpu.memory_space<vmem>>, vector<1x128xf32>
    %29 = arith.addf %28, %27 : vector<1x128xf32>
    %c1_15 = arith.constant 1 : index
    %c0_16 = arith.constant 0 : index
    %30 = vector.load %arg7[%c1_15, %c0_16] : memref<2x128xf32, #tpu.memory_space<vmem>>, vector<1x128xf32>
    tpu.vector_store %arg7[%c1_15, %c0_16], %29 {strides = array<i32>} : memref<2x128xf32, #tpu.memory_space<vmem>>, vector<1x128xf32>,
    %c0_i32_17 = arith.constant 0 : i32
    %31 = arith.cmpi eq, %arg0, %c0_i32_17 : i32
    %32 = arith.extui %31 : i1 to i32
    %c0_i32_18 = arith.constant 0 : i32
    %33 = arith.cmpi ne, %32, %c0_i32_18 : i32
    scf.if %33 {
      %c0_19 = arith.constant 0 : index
      %c0_20 = arith.constant 0 : index
      %34 = vector.load %arg7[%c0_19, %c0_20] : memref<2x128xf32, #tpu.memory_space<vmem>>, vector<2x128xf32>
      %cst_21 = arith.constant 2.000000e-01 : f32
      %35 = vector.broadcast %cst_21 : f32 to vector<2x128xf32>
      %36 = arith.mulf %34, %35 : vector<2x128xf32>
      %37 = arith.truncf %36 : vector<2x128xf32> to vector<2x128xbf16>
      %c0_22 = arith.constant 0 : index
      %c0_23 = arith.constant 0 : index
      %38 = vector.load %arg2[%c0_22, %c0_23] : memref<128x256xbf16, #tpu.memory_space<vmem>>, vector<128x256xbf16>
      %cst_24 = arith.constant dense<0.000000e+00> : vector<2x256xf32>
      %39 = tpu.matmul %37, %38, %cst_24 {dimension_numbers = #tpu.dot_dimension_numbers<[1], [0], [0], [1], [0, 0, 1, 1], [], []>} : vector<2x128xbf16>, vector<128x256xbf16>, vector<2x256xf32> -> vector<2x256xf32>
      %c0_25 = arith.constant 0 : index
      %c0_26 = arith.constant 0 : index
      %40 = vector.load %arg3[%c0_25, %c0_26] : memref<1x256xf32, #tpu.memory_space<vmem>>, vector<1x256xf32>
      %41 = vector.broadcast %40 : vector<1x256xf32> to vector<2x256xf32>
      %42 = arith.addf %39, %41 : vector<2x256xf32>
      %cst_27 = arith.constant 0.000000e+00 : f32
      %43 = vector.broadcast %cst_27 : f32 to vector<2x256xf32>
      %44 = arith.maximumf %42, %43 : vector<2x256xf32>
      %45 = arith.truncf %44 : vector<2x256xf32> to vector<2x256xbf16>
      %c0_28 = arith.constant 0 : index
      %c0_29 = arith.constant 0 : index
      %46 = vector.load %arg4[%c0_28, %c0_29] : memref<256x128xbf16, #tpu.memory_space<vmem>>, vector<256x128xbf16>
      %cst_30 = arith.constant dense<0.000000e+00> : vector<2x128xf32>
      %47 = tpu.matmul %45, %46, %cst_30 {dimension_numbers = #tpu.dot_dimension_numbers<[1], [0], [0], [1], [0, 0, 1, 1], [], []>} : vector<2x256xbf16>, vector<256x128xbf16>, vector<2x128xf32> -> vector<2x128xf32>
      %c0_31 = arith.constant 0 : index
      %c0_32 = arith.constant 0 : index
      %48 = vector.load %arg5[%c0_31, %c0_32] : memref<1x128xf32, #tpu.memory_space<vmem>>, vector<1x128xf32>
      %49 = vector.broadcast %48 : vector<1x128xf32> to vector<2x128xf32>
      %50 = arith.addf %47, %49 : vector<2x128xf32>
      %c0_33 = arith.constant 0 : index
      %c0_34 = arith.constant 0 : index
      %51 = vector.load %arg6[%c0_33, %c0_34] : memref<2x128xf32, #tpu.memory_space<vmem>>, vector<2x128xf32>
      tpu.vector_store %arg6[%c0_33, %c0_34], %50 {strides = array<i32>} : memref<2x128xf32, #tpu.memory_space<vmem>>, vector<2x128xf32>,
    } else {
    }
    return
  }
  func.func @transform_0(%arg0: i32) -> (i32, i32, i32) {
    %c0_i32 = arith.constant 0 : i32
    %c0_i32_0 = arith.constant 0 : i32
    %c0_i32_1 = arith.constant 0 : i32
    return %c0_i32, %arg0, %c0_i32_0 : i32, i32, i32
  }
  func.func @transform_1(%arg0: i32) -> (i32, i32) {
    %c0_i32 = arith.constant 0 : i32
    %c0_i32_0 = arith.constant 0 : i32
    %c0_i32_1 = arith.constant 0 : i32
    return %c0_i32, %c0_i32_0 : i32, i32
  }
  func.func @transform_2(%arg0: i32) -> (i32, i32) {
    %c0_i32 = arith.constant 0 : i32
    %c0_i32_0 = arith.constant 0 : i32
    %c0_i32_1 = arith.constant 0 : i32
    return %c0_i32, %c0_i32_0 : i32, i32
  }
  func.func @transform_3(%arg0: i32) -> (i32, i32) {
    %c0_i32 = arith.constant 0 : i32
    %c0_i32_0 = arith.constant 0 : i32
    %c0_i32_1 = arith.constant 0 : i32
    return %c0_i32, %c0_i32_0 : i32, i32
  }
  func.func @transform_4(%arg0: i32) -> (i32, i32) {
    %c0_i32 = arith.constant 0 : i32
    %c0_i32_0 = arith.constant 0 : i32
    %c0_i32_1 = arith.constant 0 : i32
    return %c0_i32, %c0_i32_0 : i32, i32
  }
  func.func @transform_5(%arg0: i32) -> (i32, i32) {
    %c0_i32 = arith.constant 0 : i32
    %c0_i32_0 = arith.constant 0 : i32
    %c0_i32_1 = arith.constant 0 : i32
    return %c0_i32, %c0_i32_0 : i32, i32
  }
}

</mosaic_0001>

<llo_original>
// kernel: vit_forward.4
$region0: #{vit_forward.4}
  #allocation0 [shape = 'u32[]', space=smem, size = 0x4, offset = 0x4, fixed_abs, tag = 'smem constant byte address 0x4 - core index']
  #allocation1 [shape = 'u32[72,128]{1,0:T(1,128)}', space=vmem, size = 0x9000, scoped, tag = 'internal scratch']
  %s0 = inlined_call_operand.vmem [shape: f32[8,64], index: 0, kind: input, shape index: {}]
  %s1 = inlined_call_operand.vmem [shape: f32[1,64], index: 1, kind: input, shape index: {}]
  %s2 = inlined_call_operand.vmem [shape: f32[1,64], index: 2, kind: input, shape index: {}]
  %s3 = inlined_call_operand.vmem [shape: bf16[64,128], index: 3, kind: input, shape index: {}]
  %s4 = inlined_call_operand.vmem [shape: f32[1,128], index: 4, kind: input, shape index: {}]
  %s5 = inlined_call_operand.vmem [shape: f32[1,128], index: 5, kind: input, shape index: {}]
  %s6 = inlined_call_operand.vmem [shape: f32[1,128], index: 6, kind: input, shape index: {}]
  %s7 = inlined_call_operand.vmem [shape: f32[8,128], index: 7, kind: output, shape index: {}]
  %s8 = sld [smem:[#allocation0]]
  $region38: #{vit_forward.4} parent=0
    _
  %s10 = ssub.s32 1, %s8
  %s11 = scalar_select 0, %s10, %s8
  // Predicated region
  $region2: #{vit_forward.4} parent=0 // pred_check
    _
  $region3: #{vit_forward.4} parent=0 // pred_check_branch
    %13 = sbr.rel (0) target = $region5
  $region4: #{vit_forward.4} parent=0 // pred_region
    _
  $region5: #{vit_forward.4} parent=0 // pred_fallthru
    _
  // Predicated region
  $region6: #{vit_forward.4} parent=0 // pred_check
    _
  $region7: #{vit_forward.4} parent=0 // pred_check_branch
    %15 = sbr.rel (0) target = $region9
  $region8: #{vit_forward.4} parent=0 // pred_region
    _
  $region9: #{vit_forward.4} parent=0 // pred_fallthru
    _
  // Predicated region
  $region10: #{vit_forward.4} parent=0 // pred_check
    _
  $region11: #{vit_forward.4} parent=0 // pred_check_branch
    %17 = sbr.rel (0) target = $region13
  $region12: #{vit_forward.4} parent=0 // pred_region
    _
  $region13: #{vit_forward.4} parent=0 // pred_fallthru
    _
  // Predicated region
  $region14: #{vit_forward.4} parent=0 // pred_check
    _
  $region15: #{vit_forward.4} parent=0 // pred_check_branch
    %19 = sbr.rel (0) target = $region17
  $region16: #{vit_forward.4} parent=0 // pred_region
    _
  $region17: #{vit_forward.4} parent=0 // pred_fallthru
    _
  // Predicated region
  $region18: #{vit_forward.4} parent=0 // pred_check
    _
  $region19: #{vit_forward.4} parent=0 // pred_check_branch
    %21 = sbr.rel (0) target = $region21
  $region20: #{vit_forward.4} parent=0 // pred_region
    _
  $region21: #{vit_forward.4} parent=0 // pred_fallthru
    _
  // Predicated region
  $region22: #{vit_forward.4} parent=0 // pred_check
    _
  $region23: #{vit_forward.4} parent=0 // pred_check_branch
    %23 = sbr.rel (0) target = $region25
  $region24: #{vit_forward.4} parent=0 // pred_region
    _
  $region25: #{vit_forward.4} parent=0 // pred_fallthru
    _
  // Predicated region
  $region26: #{vit_forward.4} parent=0 // pred_check
    _
  $region27: #{vit_forward.4} parent=0 // pred_check_branch
    %25 = sbr.rel (0) target = $region29
  $region28: #{vit_forward.4} parent=0 // pred_region
    _
  $region29: #{vit_forward.4} parent=0 // pred_fallthru
    _
  %v27 = vld [vmem:[%s0] sm:$0xff]
  %v28 = vld [vmem:[%s1] sm:$0x1]
  %v29 = vld [vmem:[%s2] sm:$0x1]
  %vm30 = vcmask 523264
  %v31 = vsel %vm30, %v27, 0.0
  %32 = vadd.xlane.f32.xlu0 %v31
  %v33 = vpop.xlane.xlu0 %32
  %v34 = vrcp.pop 64.0
  %v35 = vmul.f32 64.0, %v34
  %v36 = vsub.f32 1.0, %v35
  %v37 = vmul.f32 %v34, %v36
  %v38 = vadd.f32 %v34, %v37
  %vm39 = vweird.f32 %v34
  %v40 = vsel %vm39, %v34, %v38
  %v41 = vmul.f32 %v33, %v40
  %v42 = vsub.f32 %v27, %v41
  %v43 = vmul.f32 %v42, %v42
  %v44 = vsel %vm30, %v43, 0.0
  %45 = vadd.xlane.f32.xlu0 %v44
  %v46 = vpop.xlane.xlu0 %45
  %v47 = vmul.f32 %v46, %v40
  %v48 = vadd.f32 %v47, 1e-05
  %v49 = vrsqrt.pop %v48
  %v50 = vmul.f32 %v49, %v48
  %v51 = vmul.f32 %v50, %v49
  %v52 = vmul.f32 0.5, %v51
  %v53 = vsub.f32 1.5, %v52
  %v54 = vmul.f32 %v49, %v53
  %vm55 = vweird.f32 %v48
  %vm56 = vweird.f32 %v49
  %vm57 = vmor %vm55, %vm56
  %v58 = vsel %vm57, %v49, %v54
  %v59 = vmul.f32 %v42, %v58
  %v61 = vperm.slane %v28, 0
  %v63 = vmul.f32 %v59, %v61
  %v65 = vperm.slane %v29, 0
  %v67 = vadd.f32 %v63, %v65
  %v68 = vpack.c.bf16 %v67, %v67
  %v69 = vld [vmem:[%s3] sm:$0xf]
  %v70 = vld [vmem:[%s3 + $0x4] sm:$0xf]
  %v71 = vld [vmem:[%s3 + $0x8] sm:$0xf]
  %v72 = vld [vmem:[%s3 + $0xc] sm:$0xf]
  %v73 = vld [vmem:[%s3 + $0x10] sm:$0xf]
  %v74 = vld [vmem:[%s3 + $0x14] sm:$0xf]
  %v75 = vld [vmem:[%s3 + $0x18] sm:$0xf]
  %v76 = vld [vmem:[%s3 + $0x1c] sm:$0xf]
  %v77 = vld [vmem:[%s4] sm:$0x1]
  %v79 = vperm.slane %v77, 0
  %v89 = vunpack.c.l.b16 %v69
  %v90 = vunpack.c.l.b16 %v70
  %v91 = vunpack.c.l.b16 %v71
  %v92 = vunpack.c.l.b16 %v72
  %v93 = vunpack.c.l.b16 %v73
  %v94 = vunpack.c.l.b16 %v74
  %v95 = vunpack.c.l.b16 %v75
  %v96 = vunpack.c.l.b16 %v76
  %v97 = vpack.c.b16 %v90, %v89
  %v98 = vpack.c.b16 %v92, %v91
  %v99 = vpack.c.b16 %v94, %v93
  %v100 = vpack.c.b16 %v96, %v95
  %v106 = vsel %vm30, %v68, 0
  %108 = vmatpush.bf16.msra.mxu0 0
  %109 = vmatpush.bf16.msra.mxu0 0
  %110 = vmatpush.bf16.msra.mxu0 0
  %111 = vmatpush.bf16.msra.mxu0 0
  %112 = vmatpush.bf16.msra.mxu0 %v100
  %113 = vmatpush.bf16.msra.mxu0 %v99
  %114 = vmatpush.bf16.msra.mxu0 %v98
  %115 = vmatpush.bf16.msra.mxu0 %v97
  %116 = vmatmul.bf16.gmra.mxu0 %v106
  %v117 = vpop.f32.mrf.mxu0
  %v118 = vadd.f32 %v79, %v117
  %v119 = vpop.f32.mrf.mxu0
  %120 = vdwg.mxu0
  %v121 = vld [vmem:[%s5] sm:$0x1]
  %v122 = vld [vmem:[%s6] sm:$0x1]
  %123 = vadd.xlane.f32.xlu0 %v118
  %v124 = vpop.xlane.xlu0 %123
  %v125 = vrcp.pop 128.0
  %v126 = vmul.f32 128.0, %v125
  %v127 = vsub.f32 1.0, %v126
  %v128 = vmul.f32 %v125, %v127
  %v129 = vadd.f32 %v125, %v128
  %vm130 = vweird.f32 %v125
  %v131 = vsel %vm130, %v125, %v129
  %v132 = vmul.f32 %v124, %v131
  %v133 = vsub.f32 %v118, %v132
  %v134 = vmul.f32 %v133, %v133
  %135 = vadd.xlane.f32.xlu0 %v134
  %v136 = vpop.xlane.xlu0 %135
  %v137 = vmul.f32 %v136, %v131
  %v138 = vadd.f32 %v137, 1e-05
  %v139 = vrsqrt.pop %v138
  %v140 = vmul.f32 %v139, %v138
  %v141 = vmul.f32 %v140, %v139
  %v142 = vmul.f32 0.5, %v141
  %v143 = vsub.f32 1.5, %v142
  %v144 = vmul.f32 %v139, %v143
  %vm145 = vweird.f32 %v138
  %vm146 = vweird.f32 %v139
  %vm147 = vmor %vm145, %vm146
  %v148 = vsel %vm147, %v139, %v144
  %v149 = vmul.f32 %v133, %v148
  %v151 = vperm.slane %v121, 0
  %v153 = vmul.f32 %v149, %v151
  %v155 = vperm.slane %v122, 0
  %v157 = vadd.f32 %v153, %v155
  %158 = vst [vmem:[%s7] sm:$0xff] %v157
  // Predicated region
  $region30: #{vit_forward.4} parent=0 // pred_check
    _
  $region31: #{vit_forward.4} parent=0 // pred_check_branch
    %160 = sbr.rel (0) target = $region33
  $region32: #{vit_forward.4} parent=0 // pred_region
    _
  $region33: #{vit_forward.4} parent=0 // pred_fallthru
    _
  // Predicated region
  $region34: #{vit_forward.4} parent=0 // pred_check
    _
  $region35: #{vit_forward.4} parent=0 // pred_check_branch
    %162 = sbr.rel (0) target = $region37
  $region36: #{vit_forward.4} parent=0 // pred_region
    _
  $region37: #{vit_forward.4} parent=0 // pred_fallthru
    _

// kernel: vit_forward.7
$region0: #{vit_forward.7}
  #allocation0 [shape = 'u32[]', space=smem, size = 0x4, offset = 0x4, fixed_abs, tag = 'smem constant byte address 0x4 - core index']
  #allocation1 [shape = 'u32[72,128]{1,0:T(1,128)}', space=vmem, size = 0x9000, scoped, tag = 'internal scratch']
  #allocation2 [shape = 'f32[2,128]{1,0:T(2,128)}', space=vmem, size = 0x400, scoped, tag = 'scratch operand']
  %s0 = inlined_call_operand.vmem [shape: f32[2,5,128], index: 0, kind: input, shape index: {}]
  %s1 = inlined_call_operand.vmem [shape: bf16[128,256], index: 1, kind: input, shape index: {}]
  %s2 = inlined_call_operand.vmem [shape: f32[1,256], index: 2, kind: input, shape index: {}]
  %s3 = inlined_call_operand.vmem [shape: bf16[256,128], index: 3, kind: input, shape index: {}]
  %s4 = inlined_call_operand.vmem [shape: f32[1,128], index: 4, kind: input, shape index: {}]
  %s5 = inlined_call_operand.hbm [shape: f32[2,128], index: 5, kind: output, shape index: {}]
  %s6 = sld [smem:[#allocation0]]
  $region38: #{vit_forward.7} parent=0
    _
  %s8 = ssub.s32 1, %s6
  %s9 = scalar_select 0, %s8, %s6
  $region1: #{vit_forward.7} parent=0
    #allocation3 [shape = 'u8[1024]{0}', space=vmem, size = 0x400, scoped, tag = 'output window, operand 0, single buffered']
    #allocation4 [shape = 's32[1]{0}', space=sflag, size = 0x4, scoped, tag = 'scoped memory for vit_forward.7']
    %10 = vsyncpa [#allocation4], 0
    // Predicated region
    $region2: #{vit_forward.7} parent=1 // pred_check
      _
    $region3: #{vit_forward.7} parent=1 // pred_check_branch
      %12 = sbr.rel (0) target = $region5
    $region4: #{vit_forward.7} parent=1 // pred_region
      _
    $region5: #{vit_forward.7} parent=1 // pred_fallthru
      _
    // Predicated region
    $region6: #{vit_forward.7} parent=1 // pred_check
      _
    $region7: #{vit_forward.7} parent=1 // pred_check_branch
      %14 = sbr.rel (0) target = $region9
    $region8: #{vit_forward.7} parent=1 // pred_region
      _
    $region9: #{vit_forward.7} parent=1 // pred_fallthru
      _
    // Predicated region
    $region10: #{vit_forward.7} parent=1 // pred_check
      _
    $region11: #{vit_forward.7} parent=1 // pred_check_branch
      %16 = sbr.rel (0) target = $region13
    $region12: #{vit_forward.7} parent=1 // pred_region
      _
    $region13: #{vit_forward.7} parent=1 // pred_fallthru
      _
    // Predicated region
    $region14: #{vit_forward.7} parent=1 // pred_check
      _
    $region15: #{vit_forward.7} parent=1 // pred_check_branch
      %18 = sbr.rel (0) target = $region17
    $region16: #{vit_forward.7} parent=1 // pred_region
      _
    $region17: #{vit_forward.7} parent=1 // pred_fallthru
      _
    // Predicated region
    $region18: #{vit_forward.7} parent=1 // pred_check
      _
    $region19: #{vit_forward.7} parent=1 // pred_check_branch
      %20 = sbr.rel (0) target = $region21
    $region20: #{vit_forward.7} parent=1 // pred_region
      _
    $region21: #{vit_forward.7} parent=1 // pred_fallthru
      _
    %p21 = scmp.eq.s32.totalorder 0, 0
    // Predicated region
    $region22: #{vit_forward.7} parent=1 // pred_check
      %p22 = pneg %p21
    $region23: #{vit_forward.7} parent=1 // pred_check_branch
      %24 = sbr.rel (%p22) target = $region25
    $region24: #{vit_forward.7} parent=1 // pred_region
      %25 = vst [vmem:[#allocation2] sm:$0x3] 0.0
    $region25: #{vit_forward.7} parent=1 // pred_fallthru
      _
    %v26 = vlaneseq
    %v27 = vshrl.u32 %v26, 7
    %s28 = smul.u32 0, 5
    %v29 = vstv %s28
    %v30 = vadd.s32 %v27, %v29
    %vm31 = vcmp.lt.s32.totalorder %v30, 5
    %v32 = vld [vmem:[%s0] sm:$0x1f]
    %v33 = vsel %vm31, 1, 0
    %vm34 = vcmp.eq.s32.totalorder %v33, 1
    %v35 = vsel %vm34, %v32, 0.0
    %vm36 = vcmask 1044480
    %v37 = vsel %vm36, %v35, 0.0
    %v38 = vrot.slane %v37, 4
    %v39 = vadd.f32 %v37, %v38
    %v40 = vrot.slane %v39, 2
    %v41 = vadd.f32 %v39, %v40
    %v42 = vrot.slane %v41, 1
    %v43 = vadd.f32 %v41, %v42
    %v44 = vld [vmem:[#allocation2] sm:$0x1]
    %v45 = vadd.f32 %v44, %v43
    %46 = vst [vmem:[#allocation2] sm:$0x1] %v45
    %s47 = scalar_lea.vmem %s0, 8
    %v48 = vld [vmem:[%s47] sm:$0x1f]
    %v49 = vsel %vm34, %v48, 0.0
    %v50 = vsel %vm36, %v49, 0.0
    %v51 = vrot.slane %v50, 4
    %v52 = vadd.f32 %v50, %v51
    %v53 = vrot.slane %v52, 2
    %v54 = vadd.f32 %v52, %v53
    %v55 = vrot.slane %v54, 1
    %v56 = vadd.f32 %v54, %v55
    %v57 = vld [vmem:[#allocation2 + $0x1] sm:$0x1]
    %v58 = vadd.f32 %v57, %v56
    %59 = vst [vmem:[#allocation2 + $0x1] sm:$0x1] %v58
    // Predicated region
    $region26: #{vit_forward.7} parent=1 // pred_check
      %p60 = pneg %p21
    $region27: #{vit_forward.7} parent=1 // pred_check_branch
      %62 = sbr.rel (%p60) target = $region29
    $region28: #{vit_forward.7} parent=1 // pred_region
      %v63 = vld [vmem:[#allocation2] sm:$0x3]
      %v64 = vmul.f32 %v63, 0.2
      %v65 = vpack.c.bf16 %v64, %v64
      %v66 = vld [vmem:[%s1] sm:$0xff]
      %v67 = vld [vmem:[%s1 + $0x8] sm:$0xff]
      %v68 = vld [vmem:[%s1 + $0x10] sm:$0xff]
      %v69 = vld [vmem:[%s1 + $0x18] sm:$0xff]
      %v70 = vld [vmem:[%s1 + $0x20] sm:$0xff]
      %v71 = vld [vmem:[%s1 + $0x28] sm:$0xff]
      %v72 = vld [vmem:[%s1 + $0x30] sm:$0xff]
      %v73 = vld [vmem:[%s1 + $0x38] sm:$0xff]
      %v74 = vld [vmem:[%s1 + $0x40] sm:$0xff]
      %v75 = vld [vmem:[%s1 + $0x48] sm:$0xff]
      %v76 = vld [vmem:[%s1 + $0x50] sm:$0xff]
      %v77 = vld [vmem:[%s1 + $0x58] sm:$0xff]
      %v78 = vld [vmem:[%s1 + $0x60] sm:$0xff]
      %v79 = vld [vmem:[%s1 + $0x68] sm:$0xff]
      %v80 = vld [vmem:[%s1 + $0x70] sm:$0xff]
      %v81 = vld [vmem:[%s1 + $0x78] sm:$0xff]
      %v82 = vld [vmem:[%s2] sm:$0x3]
      %v84 = vperm.slane %v82, 0
      %v85 = vperm.slane %v82, 1
      %v104 = vunpack.c.l.b16 %v66
      %v105 = vunpack.c.h.b16 %v66
      %v106 = vunpack.c.l.b16 %v67
      %v107 = vunpack.c.h.b16 %v67
      %v108 = vunpack.c.l.b16 %v68
      %v109 = vunpack.c.h.b16 %v68
      %v110 = vunpack.c.l.b16 %v69
      %v111 = vunpack.c.h.b16 %v69
      %v112 = vunpack.c.l.b16 %v70
      %v113 = vunpack.c.h.b16 %v70
      %v114 = vunpack.c.l.b16 %v71
      %v115 = vunpack.c.h.b16 %v71
      %v116 = vunpack.c.l.b16 %v72
      %v117 = vunpack.c.h.b16 %v72
      %v118 = vunpack.c.l.b16 %v73
      %v119 = vunpack.c.h.b16 %v73
      %v120 = vunpack.c.l.b16 %v74
      %v121 = vunpack.c.h.b16 %v74
      %v122 = vunpack.c.l.b16 %v75
      %v123 = vunpack.c.h.b16 %v75
      %v124 = vunpack.c.l.b16 %v76
      %v125 = vunpack.c.h.b16 %v76
      %v126 = vunpack.c.l.b16 %v77
      %v127 = vunpack.c.h.b16 %v77
      %v128 = vunpack.c.l.b16 %v78
      %v129 = vunpack.c.h.b16 %v78
      %v130 = vunpack.c.l.b16 %v79
      %v131 = vunpack.c.h.b16 %v79
      %v132 = vunpack.c.l.b16 %v80
      %v133 = vunpack.c.h.b16 %v80
      %v134 = vunpack.c.l.b16 %v81
      %v135 = vunpack.c.h.b16 %v81
      %v136 = vpack.c.b16 %v106, %v104
      %v137 = vpack.c.b16 %v107, %v105
      %v138 = vpack.c.b16 %v110, %v108
      %v139 = vpack.c.b16 %v111, %v109
      %v140 = vpack.c.b16 %v114, %v112
      %v141 = vpack.c.b16 %v115, %v113
      %v142 = vpack.c.b16 %v118, %v116
      %v143 = vpack.c.b16 %v119, %v117
      %v144 = vpack.c.b16 %v122, %v120
      %v145 = vpack.c.b16 %v123, %v121
      %v146 = vpack.c.b16 %v126, %v124
      %v147 = vpack.c.b16 %v127, %v125
      %v148 = vpack.c.b16 %v130, %v128
      %v149 = vpack.c.b16 %v131, %v129
      %v150 = vpack.c.b16 %v134, %v132
      %v151 = vpack.c.b16 %v135, %v133
      %168 = vmatpush.bf16.msra.mxu0 %v150
      %169 = vmatpush.bf16.msra.mxu0 %v148
      %170 = vmatpush.bf16.msra.mxu0 %v146
      %171 = vmatpush.bf16.msra.mxu0 %v144
      %172 = vmatpush.bf16.msra.mxu0 %v142
      %173 = vmatpush.bf16.msra.mxu0 %v140
      %174 = vmatpush.bf16.msra.mxu0 %v138
      %175 = vmatpush.bf16.msra.mxu0 %v136
      %176 = vmatmul.bf16.gmra.mxu0 %v65
      %v177 = vpop.f32.mrf.mxu0
      %v178 = vadd.f32 %v84, %v177
      %v179 = vpop.f32.mrf.mxu0
      %180 = vdwg.mxu0
      %181 = vmatpush.bf16.msra.mxu0 %v151
      %182 = vmatpush.bf16.msra.mxu0 %v149
      %183 = vmatpush.bf16.msra.mxu0 %v147
      %184 = vmatpush.bf16.msra.mxu0 %v145
      %185 = vmatpush.bf16.msra.mxu0 %v143
      %186 = vmatpush.bf16.msra.mxu0 %v141
      %187 = vmatpush.bf16.msra.mxu0 %v139
      %188 = vmatpush.bf16.msra.mxu0 %v137
      %189 = vmatmul.bf16.gmra.mxu0 %v65
      %v190 = vpop.f32.mrf.mxu0
      %v191 = vadd.f32 %v85, %v190
      %v192 = vpop.f32.mrf.mxu0
      %193 = vdwg.mxu0
      %v194 = vmax.f32 %v178, 0.0
      %v195 = vmax.f32 %v191, 0.0
      %v196 = vpack.c.bf16 %v194, %v194
      %v197 = vpack.c.bf16 %v195, %v195
      %v198 = vld [vmem:[%s3] sm:$0xf]
      %v199 = vld [vmem:[%s3 + $0x4] sm:$0xf]
      %v200 = vld [vmem:[%s3 + $0x8] sm:$0xf]
      %v201 = vld [vmem:[%s3 + $0xc] sm:$0xf]
      %v202 = vld [vmem:[%s3 + $0x10] sm:$0xf]
      %v203 = vld [vmem:[%s3 + $0x14] sm:$0xf]
      %v204 = vld [vmem:[%s3 + $0x18] sm:$0xf]
      %v205 = vld [vmem:[%s3 + $0x1c] sm:$0xf]
      %v206 = vld [vmem:[%s3 + $0x20] sm:$0xf]
      %v207 = vld [vmem:[%s3 + $0x24] sm:$0xf]
      %v208 = vld [vmem:[%s3 + $0x28] sm:$0xf]
      %v209 = vld [vmem:[%s3 + $0x2c] sm:$0xf]
      %v210 = vld [vmem:[%s3 + $0x30] sm:$0xf]
      %v211 = vld [vmem:[%s3 + $0x34] sm:$0xf]
      %v212 = vld [vmem:[%s3 + $0x38] sm:$0xf]
      %v213 = vld [vmem:[%s3 + $0x3c] sm:$0xf]
      %v214 = vld [vmem:[%s3 + $0x40] sm:$0xf]
      %v215 = vld [vmem:[%s3 + $0x44] sm:$0xf]
      %v216 = vld [vmem:[%s3 + $0x48] sm:$0xf]
      %v217 = vld [vmem:[%s3 + $0x4c] sm:$0xf]
      %v218 = vld [vmem:[%s3 + $0x50] sm:$0xf]
      %v219 = vld [vmem:[%s3 + $0x54] sm:$0xf]
      %v220 = vld [vmem:[%s3 + $0x58] sm:$0xf]
      %v221 = vld [vmem:[%s3 + $0x5c] sm:$0xf]
      %v222 = vld [vmem:[%s3 + $0x60] sm:$0xf]
      %v223 = vld [vmem:[%s3 + $0x64] sm:$0xf]
      %v224 = vld [vmem:[%s3 + $0x68] sm:$0xf]
      %v225 = vld [vmem:[%s3 + $0x6c] sm:$0xf]
      %v226 = vld [vmem:[%s3 + $0x70] sm:$0xf]
      %v227 = vld [vmem:[%s3 + $0x74] sm:$0xf]
      %v228 = vld [vmem:[%s3 + $0x78] sm:$0xf]
      %v229 = vld [vmem:[%s3 + $0x7c] sm:$0xf]
      %v230 = vld [vmem:[%s4] sm:$0x1]
      %v232 = vperm.slane %v230, 0
      %v266 = vunpack.c.l.b16 %v198
      %v267 = vunpack.c.l.b16 %v199
      %v268 = vunpack.c.l.b16 %v200
      %v269 = vunpack.c.l.b16 %v201
      %v270 = vunpack.c.l.b16 %v202
      %v271 = vunpack.c.l.b16 %v203
      %v272 = vunpack.c.l.b16 %v204
      %v273 = vunpack.c.l.b16 %v205
      %v274 = vunpack.c.l.b16 %v206
      %v275 = vunpack.c.l.b16 %v207
      %v276 = vunpack.c.l.b16 %v208
      %v277 = vunpack.c.l.b16 %v209
      %v278 = vunpack.c.l.b16 %v210
      %v279 = vunpack.c.l.b16 %v211
      %v280 = vunpack.c.l.b16 %v212
      %v281 = vunpack.c.l.b16 %v213
      %v282 = vunpack.c.l.b16 %v214
      %v283 = vunpack.c.l.b16 %v215
      %v284 = vunpack.c.l.b16 %v216
      %v285 = vunpack.c.l.b16 %v217
      %v286 = vunpack.c.l.b16 %v218
      %v287 = vunpack.c.l.b16 %v219
      %v288 = vunpack.c.l.b16 %v220
      %v289 = vunpack.c.l.b16 %v221
      %v290 = vunpack.c.l.b16 %v222
      %v291 = vunpack.c.l.b16 %v223
      %v292 = vunpack.c.l.b16 %v224
      %v293 = vunpack.c.l.b16 %v225
      %v294 = vunpack.c.l.b16 %v226
      %v295 = vunpack.c.l.b16 %v227
      %v296 = vunpack.c.l.b16 %v228
      %v297 = vunpack.c.l.b16 %v229
      %v298 = vpack.c.b16 %v267, %v266
      %v299 = vpack.c.b16 %v269, %v268
      %v300 = vpack.c.b16 %v271, %v270
      %v301 = vpack.c.b16 %v273, %v272
      %v302 = vpack.c.b16 %v275, %v274
      %v303 = vpack.c.b16 %v277, %v276
      %v304 = vpack.c.b16 %v279, %v278
      %v305 = vpack.c.b16 %v281, %v280
      %v306 = vpack.c.b16 %v283, %v282
      %v307 = vpack.c.b16 %v285, %v284
      %v308 = vpack.c.b16 %v287, %v286
      %v309 = vpack.c.b16 %v289, %v288
      %v310 = vpack.c.b16 %v291, %v290
      %v311 = vpack.c.b16 %v293, %v292
      %v312 = vpack.c.b16 %v295, %v294
      %v313 = vpack.c.b16 %v297, %v296
      %330 = vmatpush.bf16.msra.mxu0 %v305
      %331 = vmatpush.bf16.msra.mxu0 %v304
      %332 = vmatpush.bf16.msra.mxu0 %v303
      %333 = vmatpush.bf16.msra.mxu0 %v302
      %334 = vmatpush.bf16.msra.mxu0 %v301
      %335 = vmatpush.bf16.msra.mxu0 %v300
      %336 = vmatpush.bf16.msra.mxu0 %v299
      %337 = vmatpush.bf16.msra.mxu0 %v298
      %338 = vmatmul.bf16.gmra.mxu0 %v196
      %v339 = vpop.f32.mrf.mxu0
      %v340 = vadd.f32 %v232, %v339
      %v341 = vpop.f32.mrf.mxu0
      %342 = vdwg.mxu0
      %343 = vmatpush.bf16.msra.mxu0 %v313
      %344 = vmatpush.bf16.msra.mxu0 %v312
      %345 = vmatpush.bf16.msra.mxu0 %v311
      %346 = vmatpush.bf16.msra.mxu0 %v310
      %347 = vmatpush.bf16.msra.mxu0 %v309
      %348 = vmatpush.bf16.msra.mxu0 %v308
      %349 = vmatpush.bf16.msra.mxu0 %v307
      %350 = vmatpush.bf16.msra.mxu0 %v306
      %351 = vmatmul.bf16.gmra.mxu0 %v197
      %v352 = vpop.f32.mrf.mxu0
      %v353 = vadd.f32 %v340, %v352
      %v354 = vpop.f32.mrf.mxu0
      %355 = vdwg.mxu0
      %356 = vst [vmem:[#allocation3] sm:$0x3] %v353
    $region29: #{vit_forward.7} parent=1 // pred_fallthru
      _
    // Predicated region
    $region30: #{vit_forward.7} parent=1 // pred_check
      _
    $region31: #{vit_forward.7} parent=1 // pred_check_branch
      %358 = sbr.rel (0) target = $region33
    $region32: #{vit_forward.7} parent=1 // pred_region
      %360 = vsyncadd [#allocation4], 0
      %s362 = sshll.u32 [#allocation3], 4
      %s363 = int_to_ptr.vmem [resolvable:$true] %s362
      %s364 = sshll.u32 %s5, 4
      %s365 = int_to_ptr.hbm [resolvable:$true] %s364
      %367 = dma.vmem_to_hbm [thread:$0]  %s363, 32, %s365, [#allocation4]
    $region33: #{vit_forward.7} parent=1 // pred_fallthru
      _
    // Predicated region
    $region34: #{vit_forward.7} parent=1 // pred_check
      _
    $region35: #{vit_forward.7} parent=1 // pred_check_branch
      %369 = sbr.rel (0) target = $region37
    $region36: #{vit_forward.7} parent=1 // pred_region
      %371 = dma.done [#allocation4], 32
    $region37: #{vit_forward.7} parent=1 // pred_fallthru
      _
    %372 = vsyncpa [#allocation4], 1

// kernel: vit_forward.5
$region0: #{vit_forward.5}
  #allocation0 [shape = 'u32[]', space=smem, size = 0x4, offset = 0x4, fixed_abs, tag = 'smem constant byte address 0x4 - core index']
  #allocation1 [shape = 'u32[72,128]{1,0:T(1,128)}', space=vmem, size = 0x9000, scoped, tag = 'internal scratch']
  #allocation2 [shape = 'f32[2,5,384]{2,1,0:T(8,128)}', space=vmem, size = 0x6000, scoped, tag = 'scratch operand']
  %s0 = inlined_call_operand.vmem [shape: f32[2,5,128], index: 0, kind: input, shape index: {}]
  %s1 = inlined_call_operand.vmem [shape: f32[1,128], index: 1, kind: input, shape index: {}]
  %s2 = inlined_call_operand.vmem [shape: f32[1,128], index: 2, kind: input, shape index: {}]
  %s3 = inlined_call_operand.vmem [shape: bf16[128,384], index: 3, kind: input, shape index: {}]
  %s4 = inlined_call_operand.vmem [shape: f32[1,384], index: 4, kind: input, shape index: {}]
  %s5 = inlined_call_operand.vmem [shape: bf16[128,128], index: 5, kind: input, shape index: {}]
  %s6 = inlined_call_operand.vmem [shape: f32[1,128], index: 6, kind: input, shape index: {}]
  %s7 = inlined_call_operand.vmem [shape: f32[1,128], index: 7, kind: input, shape index: {}]
  %s8 = inlined_call_operand.vmem [shape: f32[1,128], index: 8, kind: input, shape index: {}]
  %s9 = inlined_call_operand.vmem [shape: bf16[128,256], index: 9, kind: input, shape index: {}]
  %s10 = inlined_call_operand.vmem [shape: f32[1,256], index: 10, kind: input, shape index: {}]
  %s11 = inlined_call_operand.vmem [shape: bf16[256,128], index: 11, kind: input, shape index: {}]
  %s12 = inlined_call_operand.vmem [shape: f32[1,128], index: 12, kind: input, shape index: {}]
  %s13 = inlined_call_operand.vmem [shape: f32[2,5,128], index: 13, kind: output, shape index: {}]
  %s14 = sld [smem:[#allocation0]]
  $region62: #{vit_forward.5} parent=0
    _
  %s16 = ssub.s32 1, %s14
  %s17 = scalar_select 0, %s16, %s14
  // Predicated region
  $region2: #{vit_forward.5} parent=0 // pred_check
    _
  $region3: #{vit_forward.5} parent=0 // pred_check_branch
    %19 = sbr.rel (0) target = $region5
  $region4: #{vit_forward.5} parent=0 // pred_region
    _
  $region5: #{vit_forward.5} parent=0 // pred_fallthru
    _
  // Predicated region
  $region6: #{vit_forward.5} parent=0 // pred_check
    _
  $region7: #{vit_forward.5} parent=0 // pred_check_branch
    %21 = sbr.rel (0) target = $region9
  $region8: #{vit_forward.5} parent=0 // pred_region
    _
  $region9: #{vit_forward.5} parent=0 // pred_fallthru
    _
  // Predicated region
  $region10: #{vit_forward.5} parent=0 // pred_check
    _
  $region11: #{vit_forward.5} parent=0 // pred_check_branch
    %23 = sbr.rel (0) target = $region13
  $region12: #{vit_forward.5} parent=0 // pred_region
    _
  $region13: #{vit_forward.5} parent=0 // pred_fallthru
    _
  // Predicated region
  $region14: #{vit_forward.5} parent=0 // pred_check
    _
  $region15: #{vit_forward.5} parent=0 // pred_check_branch
    %25 = sbr.rel (0) target = $region17
  $region16: #{vit_forward.5} parent=0 // pred_region
    _
  $region17: #{vit_forward.5} parent=0 // pred_fallthru
    _
  // Predicated region
  $region18: #{vit_forward.5} parent=0 // pred_check
    _
  $region19: #{vit_forward.5} parent=0 // pred_check_branch
    %27 = sbr.rel (0) target = $region21
  $region20: #{vit_forward.5} parent=0 // pred_region
    _
  $region21: #{vit_forward.5} parent=0 // pred_fallthru
    _
  // Predicated region
  $region22: #{vit_forward.5} parent=0 // pred_check
    _
  $region23: #{vit_forward.5} parent=0 // pred_check_branch
    %29 = sbr.rel (0) target = $region25
  $region24: #{vit_forward.5} parent=0 // pred_region
    _
  $region25: #{vit_forward.5} parent=0 // pred_fallthru
    _
  // Predicated region
  $region26: #{vit_forward.5} parent=0 // pred_check
    _
  $region27: #{vit_forward.5} parent=0 // pred_check_branch
    %31 = sbr.rel (0) target = $region29
  $region28: #{vit_forward.5} parent=0 // pred_region
    _
  $region29: #{vit_forward.5} parent=0 // pred_fallthru
    _
  // Predicated region
  $region30: #{vit_forward.5} parent=0 // pred_check
    _
  $region31: #{vit_forward.5} parent=0 // pred_check_branch
    %33 = sbr.rel (0) target = $region33
  $region32: #{vit_forward.5} parent=0 // pred_region
    _
  $region33: #{vit_forward.5} parent=0 // pred_fallthru
    _
  // Predicated region
  $region34: #{vit_forward.5} parent=0 // pred_check
    _
  $region35: #{vit_forward.5} parent=0 // pred_check_branch
    %35 = sbr.rel (0) target = $region37
  $region36: #{vit_forward.5} parent=0 // pred_region
    _
  $region37: #{vit_forward.5} parent=0 // pred_fallthru
    _
  // Predicated region
  $region38: #{vit_forward.5} parent=0 // pred_check
    _
  $region39: #{vit_forward.5} parent=0 // pred_check_branch
    %37 = sbr.rel (0) target = $region41
  $region40: #{vit_forward.5} parent=0 // pred_region
    _
  $region41: #{vit_forward.5} parent=0 // pred_fallthru
    _
  // Predicated region
  $region42: #{vit_forward.5} parent=0 // pred_check
    _
  $region43: #{vit_forward.5} parent=0 // pred_check_branch
    %39 = sbr.rel (0) target = $region45
  $region44: #{vit_forward.5} parent=0 // pred_region
    _
  $region45: #{vit_forward.5} parent=0 // pred_fallthru
    _
  // Predicated region
  $region46: #{vit_forward.5} parent=0 // pred_check
    _
  $region47: #{vit_forward.5} parent=0 // pred_check_branch
    %41 = sbr.rel (0) target = $region49
  $region48: #{vit_forward.5} parent=0 // pred_region
    _
  $region49: #{vit_forward.5} parent=0 // pred_fallthru
    _
  // Predicated region
  $region50: #{vit_forward.5} parent=0 // pred_check
    _
  $region51: #{vit_forward.5} parent=0 // pred_check_branch
    %43 = sbr.rel (0) target = $region53
  $region52: #{vit_forward.5} parent=0 // pred_region
    _
  $region53: #{vit_forward.5} parent=0 // pred_fallthru
    _
  %v44 = vld [vmem:[%s0] sm:$0x1f]
  %v45 = vld [vmem:[%s1] sm:$0x1]
  %v46 = vld [vmem:[%s2] sm:$0x1]
  %vm47 = vcmask 1044480
  %v48 = vsel %vm47, %v44, 0.0
  %49 = vadd.xlane.f32.xlu0 %v48
  %v50 = vpop.xlane.xlu0 %49
  %v51 = vrcp.pop 128.0
  %v52 = vmul.f32 128.0, %v51
  %v53 = vsub.f32 1.0, %v52
  %v54 = vmul.f32 %v51, %v53
  %v55 = vadd.f32 %v51, %v54
  %vm56 = vweird.f32 %v51
  %v57 = vsel %vm56, %v51, %v55
  %v58 = vmul.f32 %v50, %v57
  %v59 = vsub.f32 %v44, %v58
  %v60 = vmul.f32 %v59, %v59
  %v61 = vsel %vm47, %v60, 0.0
  %62 = vadd.xlane.f32.xlu0 %v61
  %v63 = vpop.xlane.xlu0 %62
  %v64 = vmul.f32 %v63, %v57
  %v65 = vadd.f32 %v64, 1e-05
  %v66 = vrsqrt.pop %v65
  %v67 = vmul.f32 %v66, %v65
  %v68 = vmul.f32 %v67, %v66
  %v69 = vmul.f32 0.5, %v68
  %v70 = vsub.f32 1.5, %v69
  %v71 = vmul.f32 %v66, %v70
  %vm72 = vweird.f32 %v65
  %vm73 = vweird.f32 %v66
  %vm74 = vmor %vm72, %vm73
  %v75 = vsel %vm74, %v66, %v71
  %v76 = vmul.f32 %v59, %v75
  %v78 = vperm.slane %v45, 0
  %v80 = vmul.f32 %v76, %v78
  %v82 = vperm.slane %v46, 0
  %v84 = vadd.f32 %v80, %v82
  %v85 = vpack.c.bf16 %v84, %v84
  %v86 = vld [vmem:[%s3] sm:$0xff]
  %v87 = vld [vmem:[%s3 + $0x8] sm:$0xf]
  %v88 = vld [vmem:[%s3 + $0xc] sm:$0xff]
  %v89 = vld [vmem:[%s3 + $0x14] sm:$0xf]
  %v90 = vld [vmem:[%s3 + $0x18] sm:$0xff]
  %v91 = vld [vmem:[%s3 + $0x20] sm:$0xf]
  %v92 = vld [vmem:[%s3 + $0x24] sm:$0xff]
  %v93 = vld [vmem:[%s3 + $0x2c] sm:$0xf]
  %v94 = vld [vmem:[%s3 + $0x30] sm:$0xff]
  %v95 = vld [vmem:[%s3 + $0x38] sm:$0xf]
  %v96 = vld [vmem:[%s3 + $0x3c] sm:$0xff]
  %v97 = vld [vmem:[%s3 + $0x44] sm:$0xf]
  %v98 = vld [vmem:[%s3 + $0x48] sm:$0xff]
  %v99 = vld [vmem:[%s3 + $0x50] sm:$0xf]
  %v100 = vld [vmem:[%s3 + $0x54] sm:$0xff]
  %v101 = vld [vmem:[%s3 + $0x5c] sm:$0xf]
  %v102 = vld [vmem:[%s3 + $0x60] sm:$0xff]
  %v103 = vld [vmem:[%s3 + $0x68] sm:$0xf]
  %v104 = vld [vmem:[%s3 + $0x6c] sm:$0xff]
  %v105 = vld [vmem:[%s3 + $0x74] sm:$0xf]
  %v106 = vld [vmem:[%s3 + $0x78] sm:$0xff]
  %v107 = vld [vmem:[%s3 + $0x80] sm:$0xf]
  %v108 = vld [vmem:[%s3 + $0x84] sm:$0xff]
  %v109 = vld [vmem:[%s3 + $0x8c] sm:$0xf]
  %v110 = vld [vmem:[%s3 + $0x90] sm:$0xff]
  %v111 = vld [vmem:[%s3 + $0x98] sm:$0xf]
  %v112 = vld [vmem:[%s3 + $0x9c] sm:$0xff]
  %v113 = vld [vmem:[%s3 + $0xa4] sm:$0xf]
  %v114 = vld [vmem:[%s3 + $0xa8] sm:$0xff]
  %v115 = vld [vmem:[%s3 + $0xb0] sm:$0xf]
  %v116 = vld [vmem:[%s3 + $0xb4] sm:$0xff]
  %v117 = vld [vmem:[%s3 + $0xbc] sm:$0xf]
  %v118 = vld [vmem:[%s4] sm:$0x7]
  %v120 = vperm.slane %v118, 0
  %v121 = vperm.slane %v118, 1
  %v122 = vperm.slane %v118, 2
  %v158 = vunpack.c.l.b16 %v86
  %v159 = vunpack.c.h.b16 %v86
  %v160 = vunpack.c.l.b16 %v87
  %v161 = vunpack.c.l.b16 %v88
  %v162 = vunpack.c.h.b16 %v88
  %v163 = vunpack.c.l.b16 %v89
  %v164 = vunpack.c.l.b16 %v90
  %v165 = vunpack.c.h.b16 %v90
  %v166 = vunpack.c.l.b16 %v91
  %v167 = vunpack.c.l.b16 %v92
  %v168 = vunpack.c.h.b16 %v92
  %v169 = vunpack.c.l.b16 %v93
  %v170 = vunpack.c.l.b16 %v94
  %v171 = vunpack.c.h.b16 %v94
  %v172 = vunpack.c.l.b16 %v95
  %v173 = vunpack.c.l.b16 %v96
  %v174 = vunpack.c.h.b16 %v96
  %v175 = vunpack.c.l.b16 %v97
  %v176 = vunpack.c.l.b16 %v98
  %v177 = vunpack.c.h.b16 %v98
  %v178 = vunpack.c.l.b16 %v99
  %v179 = vunpack.c.l.b16 %v100
  %v180 = vunpack.c.h.b16 %v100
  %v181 = vunpack.c.l.b16 %v101
  %v182 = vunpack.c.l.b16 %v102
  %v183 = vunpack.c.h.b16 %v102
  %v184 = vunpack.c.l.b16 %v103
  %v185 = vunpack.c.l.b16 %v104
  %v186 = vunpack.c.h.b16 %v104
  %v187 = vunpack.c.l.b16 %v105
  %v188 = vunpack.c.l.b16 %v106
  %v189 = vunpack.c.h.b16 %v106
  %v190 = vunpack.c.l.b16 %v107
  %v191 = vunpack.c.l.b16 %v108
  %v192 = vunpack.c.h.b16 %v108
  %v193 = vunpack.c.l.b16 %v109
  %v194 = vunpack.c.l.b16 %v110
  %v195 = vunpack.c.h.b16 %v110
  %v196 = vunpack.c.l.b16 %v111
  %v197 = vunpack.c.l.b16 %v112
  %v198 = vunpack.c.h.b16 %v112
  %v199 = vunpack.c.l.b16 %v113
  %v200 = vunpack.c.l.b16 %v114
  %v201 = vunpack.c.h.b16 %v114
  %v202 = vunpack.c.l.b16 %v115
  %v203 = vunpack.c.l.b16 %v116
  %v204 = vunpack.c.h.b16 %v116
  %v205 = vunpack.c.l.b16 %v117
  %v206 = vpack.c.b16 %v161, %v158
  %v207 = vpack.c.b16 %v162, %v159
  %v208 = vpack.c.b16 %v163, %v160
  %v209 = vpack.c.b16 %v167, %v164
  %v210 = vpack.c.b16 %v168, %v165
  %v211 = vpack.c.b16 %v169, %v166
  %v212 = vpack.c.b16 %v173, %v170
  %v213 = vpack.c.b16 %v174, %v171
  %v214 = vpack.c.b16 %v175, %v172
  %v215 = vpack.c.b16 %v179, %v176
  %v216 = vpack.c.b16 %v180, %v177
  %v217 = vpack.c.b16 %v181, %v178
  %v218 = vpack.c.b16 %v185, %v182
  %v219 = vpack.c.b16 %v186, %v183
  %v220 = vpack.c.b16 %v187, %v184
  %v221 = vpack.c.b16 %v191, %v188
  %v222 = vpack.c.b16 %v192, %v189
  %v223 = vpack.c.b16 %v193, %v190
  %v224 = vpack.c.b16 %v197, %v194
  %v225 = vpack.c.b16 %v198, %v195
  %v226 = vpack.c.b16 %v199, %v196
  %v227 = vpack.c.b16 %v203, %v200
  %v228 = vpack.c.b16 %v204, %v201
  %v229 = vpack.c.b16 %v205, %v202
  %254 = vmatpush.bf16.msra.mxu0 %v227
  %255 = vmatpush.bf16.msra.mxu0 %v224
  %256 = vmatpush.bf16.msra.mxu0 %v221
  %257 = vmatpush.bf16.msra.mxu0 %v218
  %258 = vmatpush.bf16.msra.mxu0 %v215
  %259 = vmatpush.bf16.msra.mxu0 %v212
  %260 = vmatpush.bf16.msra.mxu0 %v209
  %261 = vmatpush.bf16.msra.mxu0 %v206
  %262 = vmatmul.bf16.gmra.mxu0 %v85
  %v263 = vpop.f32.mrf.mxu0
  %v264 = vadd.f32 %v120, %v263
  %v265 = vpop.f32.mrf.mxu0
  %266 = vdwg.mxu0
  %267 = vmatpush.bf16.msra.mxu0 %v228
  %268 = vmatpush.bf16.msra.mxu0 %v225
  %269 = vmatpush.bf16.msra.mxu0 %v222
  %270 = vmatpush.bf16.msra.mxu0 %v219
  %271 = vmatpush.bf16.msra.mxu0 %v216
  %272 = vmatpush.bf16.msra.mxu0 %v213
  %273 = vmatpush.bf16.msra.mxu0 %v210
  %274 = vmatpush.bf16.msra.mxu0 %v207
  %275 = vmatmul.bf16.gmra.mxu0 %v85
  %v276 = vpop.f32.mrf.mxu0
  %v277 = vadd.f32 %v121, %v276
  %v278 = vpop.f32.mrf.mxu0
  %279 = vdwg.mxu0
  %280 = vmatpush.bf16.msra.mxu0 %v229
  %281 = vmatpush.bf16.msra.mxu0 %v226
  %282 = vmatpush.bf16.msra.mxu0 %v223
  %283 = vmatpush.bf16.msra.mxu0 %v220
  %284 = vmatpush.bf16.msra.mxu0 %v217
  %285 = vmatpush.bf16.msra.mxu0 %v214
  %286 = vmatpush.bf16.msra.mxu0 %v211
  %287 = vmatpush.bf16.msra.mxu0 %v208
  %288 = vmatmul.bf16.gmra.mxu0 %v85
  %v289 = vpop.f32.mrf.mxu0
  %v290 = vadd.f32 %v122, %v289
  %v291 = vpop.f32.mrf.mxu0
  %292 = vdwg.mxu0
  %293 = vst [vmem:[#allocation2] sm:$0x1f] %v264
  %294 = vst [vmem:[#allocation2 + $0x8] sm:$0x1f] %v277
  %295 = vst [vmem:[#allocation2 + $0x10] sm:$0x1f] %v290
  %s296 = scalar_lea.vmem %s0, 8
  %v297 = vld [vmem:[%s296] sm:$0x1f]
  %v298 = vld [vmem:[%s1] sm:$0x1]
  %v299 = vld [vmem:[%s2] sm:$0x1]
  %v300 = vsel %vm47, %v297, 0.0
  %301 = vadd.xlane.f32.xlu0 %v300
  %v302 = vpop.xlane.xlu0 %301
  %v303 = vmul.f32 %v302, %v57
  %v304 = vsub.f32 %v297, %v303
  %v305 = vmul.f32 %v304, %v304
  %v306 = vsel %vm47, %v305, 0.0
  %307 = vadd.xlane.f32.xlu0 %v306
  %v308 = vpop.xlane.xlu0 %307
  %v309 = vmul.f32 %v308, %v57
  %v310 = vadd.f32 %v309, 1e-05
  %v311 = vrsqrt.pop %v310
  %v312 = vmul.f32 %v311, %v310
  %v313 = vmul.f32 %v312, %v311
  %v314 = vmul.f32 0.5, %v313
  %v315 = vsub.f32 1.5, %v314
  %v316 = vmul.f32 %v311, %v315
  %vm317 = vweird.f32 %v310
  %vm318 = vweird.f32 %v311
  %vm319 = vmor %vm317, %vm318
  %v320 = vsel %vm319, %v311, %v316
  %v321 = vmul.f32 %v304, %v320
  %v323 = vperm.slane %v298, 0
  %v325 = vmul.f32 %v321, %v323
  %v327 = vperm.slane %v299, 0
  %v329 = vadd.f32 %v325, %v327
  %v330 = vpack.c.bf16 %v329, %v329
  %v331 = vld [vmem:[%s3] sm:$0xff]
  %v332 = vld [vmem:[%s3 + $0x8] sm:$0xf]
  %v333 = vld [vmem:[%s3 + $0xc] sm:$0xff]
  %v334 = vld [vmem:[%s3 + $0x14] sm:$0xf]
  %v335 = vld [vmem:[%s3 + $0x18] sm:$0xff]
  %v336 = vld [vmem:[%s3 + $0x20] sm:$0xf]
  %v337 = vld [vmem:[%s3 + $0x24] sm:$0xff]
  %v338 = vld [vmem:[%s3 + $0x2c] sm:$0xf]
  %v339 = vld [vmem:[%s3 + $0x30] sm:$0xff]
  %v340 = vld [vmem:[%s3 + $0x38] sm:$0xf]
  %v341 = vld [vmem:[%s3 + $0x3c] sm:$0xff]
  %v342 = vld [vmem:[%s3 + $0x44] sm:$0xf]
  %v343 = vld [vmem:[%s3 + $0x48] sm:$0xff]
  %v344 = vld [vmem:[%s3 + $0x50] sm:$0xf]
  %v345 = vld [vmem:[%s3 + $0x54] sm:$0xff]
  %v346 = vld [vmem:[%s3 + $0x5c] sm:$0xf]
  %v347 = vld [vmem:[%s3 + $0x60] sm:$0xff]
  %v348 = vld [vmem:[%s3 + $0x68] sm:$0xf]
  %v349 = vld [vmem:[%s3 + $0x6c] sm:$0xff]
  %v350 = vld [vmem:[%s3 + $0x74] sm:$0xf]
  %v351 = vld [vmem:[%s3 + $0x78] sm:$0xff]
  %v352 = vld [vmem:[%s3 + $0x80] sm:$0xf]
  %v353 = vld [vmem:[%s3 + $0x84] sm:$0xff]
  %v354 = vld [vmem:[%s3 + $0x8c] sm:$0xf]
  %v355 = vld [vmem:[%s3 + $0x90] sm:$0xff]
  %v356 = vld [vmem:[%s3 + $0x98] sm:$0xf]
  %v357 = vld [vmem:[%s3 + $0x9c] sm:$0xff]
  %v358 = vld [vmem:[%s3 + $0xa4] sm:$0xf]
  %v359 = vld [vmem:[%s3 + $0xa8] sm:$0xff]
  %v360 = vld [vmem:[%s3 + $0xb0] sm:$0xf]
  %v361 = vld [vmem:[%s3 + $0xb4] sm:$0xff]
  %v362 = vld [vmem:[%s3 + $0xbc] sm:$0xf]
  %v363 = vld [vmem:[%s4] sm:$0x7]
  %v365 = vperm.slane %v363, 0
  %v366 = vperm.slane %v363, 1
  %v367 = vperm.slane %v363, 2
  %v403 = vunpack.c.l.b16 %v331
  %v404 = vunpack.c.h.b16 %v331
  %v405 = vunpack.c.l.b16 %v332
  %v406 = vunpack.c.l.b16 %v333
  %v407 = vunpack.c.h.b16 %v333
  %v408 = vunpack.c.l.b16 %v334
  %v409 = vunpack.c.l.b16 %v335
  %v410 = vunpack.c.h.b16 %v335
  %v411 = vunpack.c.l.b16 %v336
  %v412 = vunpack.c.l.b16 %v337
  %v413 = vunpack.c.h.b16 %v337
  %v414 = vunpack.c.l.b16 %v338
  %v415 = vunpack.c.l.b16 %v339
  %v416 = vunpack.c.h.b16 %v339
  %v417 = vunpack.c.l.b16 %v340
  %v418 = vunpack.c.l.b16 %v341
  %v419 = vunpack.c.h.b16 %v341
  %v420 = vunpack.c.l.b16 %v342
  %v421 = vunpack.c.l.b16 %v343
  %v422 = vunpack.c.h.b16 %v343
  %v423 = vunpack.c.l.b16 %v344
  %v424 = vunpack.c.l.b16 %v345
  %v425 = vunpack.c.h.b16 %v345
  %v426 = vunpack.c.l.b16 %v346
  %v427 = vunpack.c.l.b16 %v347
  %v428 = vunpack.c.h.b16 %v347
  %v429 = vunpack.c.l.b16 %v348
  %v430 = vunpack.c.l.b16 %v349
  %v431 = vunpack.c.h.b16 %v349
  %v432 = vunpack.c.l.b16 %v350
  %v433 = vunpack.c.l.b16 %v351
  %v434 = vunpack.c.h.b16 %v351
  %v435 = vunpack.c.l.b16 %v352
  %v436 = vunpack.c.l.b16 %v353
  %v437 = vunpack.c.h.b16 %v353
  %v438 = vunpack.c.l.b16 %v354
  %v439 = vunpack.c.l.b16 %v355
  %v440 = vunpack.c.h.b16 %v355
  %v441 = vunpack.c.l.b16 %v356
  %v442 = vunpack.c.l.b16 %v357
  %v443 = vunpack.c.h.b16 %v357
  %v444 = vunpack.c.l.b16 %v358
  %v445 = vunpack.c.l.b16 %v359
  %v446 = vunpack.c.h.b16 %v359
  %v447 = vunpack.c.l.b16 %v360
  %v448 = vunpack.c.l.b16 %v361
  %v449 = vunpack.c.h.b16 %v361
  %v450 = vunpack.c.l.b16 %v362
  %v451 = vpack.c.b16 %v406, %v403
  %v452 = vpack.c.b16 %v407, %v404
  %v453 = vpack.c.b16 %v408, %v405
  %v454 = vpack.c.b16 %v412, %v409
  %v455 = vpack.c.b16 %v413, %v410
  %v456 = vpack.c.b16 %v414, %v411
  %v457 = vpack.c.b16 %v418, %v415
  %v458 = vpack.c.b16 %v419, %v416
  %v459 = vpack.c.b16 %v420, %v417
  %v460 = vpack.c.b16 %v424, %v421
  %v461 = vpack.c.b16 %v425, %v422
  %v462 = vpack.c.b16 %v426, %v423
  %v463 = vpack.c.b16 %v430, %v427
  %v464 = vpack.c.b16 %v431, %v428
  %v465 = vpack.c.b16 %v432, %v429
  %v466 = vpack.c.b16 %v436, %v433
  %v467 = vpack.c.b16 %v437, %v434
  %v468 = vpack.c.b16 %v438, %v435
  %v469 = vpack.c.b16 %v442, %v439
  %v470 = vpack.c.b16 %v443, %v440
  %v471 = vpack.c.b16 %v444, %v441
  %v472 = vpack.c.b16 %v448, %v445
  %v473 = vpack.c.b16 %v449, %v446
  %v474 = vpack.c.b16 %v450, %v447
  %499 = vmatpush.bf16.msra.mxu0 %v472
  %500 = vmatpush.bf16.msra.mxu0 %v469
  %501 = vmatpush.bf16.msra.mxu0 %v466
  %502 = vmatpush.bf16.msra.mxu0 %v463
  %503 = vmatpush.bf16.msra.mxu0 %v460
  %504 = vmatpush.bf16.msra.mxu0 %v457
  %505 = vmatpush.bf16.msra.mxu0 %v454
  %506 = vmatpush.bf16.msra.mxu0 %v451
  %507 = vmatmul.bf16.gmra.mxu0 %v330
  %v508 = vpop.f32.mrf.mxu0
  %v509 = vadd.f32 %v365, %v508
  %v510 = vpop.f32.mrf.mxu0
  %511 = vdwg.mxu0
  %512 = vmatpush.bf16.msra.mxu0 %v473
  %513 = vmatpush.bf16.msra.mxu0 %v470
  %514 = vmatpush.bf16.msra.mxu0 %v467
  %515 = vmatpush.bf16.msra.mxu0 %v464
  %516 = vmatpush.bf16.msra.mxu0 %v461
  %517 = vmatpush.bf16.msra.mxu0 %v458
  %518 = vmatpush.bf16.msra.mxu0 %v455
  %519 = vmatpush.bf16.msra.mxu0 %v452
  %520 = vmatmul.bf16.gmra.mxu0 %v330
  %v521 = vpop.f32.mrf.mxu0
  %v522 = vadd.f32 %v366, %v521
  %v523 = vpop.f32.mrf.mxu0
  %524 = vdwg.mxu0
  %525 = vmatpush.bf16.msra.mxu0 %v474
  %526 = vmatpush.bf16.msra.mxu0 %v471
  %527 = vmatpush.bf16.msra.mxu0 %v468
  %528 = vmatpush.bf16.msra.mxu0 %v465
  %529 = vmatpush.bf16.msra.mxu0 %v462
  %530 = vmatpush.bf16.msra.mxu0 %v459
  %531 = vmatpush.bf16.msra.mxu0 %v456
  %532 = vmatpush.bf16.msra.mxu0 %v453
  %533 = vmatmul.bf16.gmra.mxu0 %v330
  %v534 = vpop.f32.mrf.mxu0
  %v535 = vadd.f32 %v367, %v534
  %v536 = vpop.f32.mrf.mxu0
  %537 = vdwg.mxu0
  %s538 = scalar_lea.vmem [#allocation2], 24
  %539 = vst [vmem:[%s538] sm:$0x1f] %v509
  %540 = vst [vmem:[%s538 + $0x8] sm:$0x1f] %v522
  %541 = vst [vmem:[%s538 + $0x10] sm:$0x1f] %v535
  %v542 = vld [vmem:[#allocation2] sm:$0x1f]
  %v543 = vld [vmem:[#allocation2 + $0x8] sm:$0x1f]
  %v544 = vld [vmem:[#allocation2 + $0x10] sm:$0x1f]
  %v545 = vmul.f32 %v542, 0.088388346
  %v546 = vmul.f32 %v545, %v543
  %v547 = vsel %vm47, %v546, 0.0
  %548 = vadd.xlane.f32.xlu0 %v547
  %v549 = vpop.xlane.xlu0 %548
  %v550 = vld [vmem:[%s538 + $0x8] sm:$0x1f]
  %v551 = vld [vmem:[%s538 + $0x10] sm:$0x1f]
  %v552 = vmul.f32 %v545, %v550
  %v553 = vsel %vm47, %v552, 0.0
  %554 = vadd.xlane.f32.xlu0 %v553
  %v555 = vpop.xlane.xlu0 %554
  %v556 = vmax.f32 %v549, %v555
  %v557 = vsub.f32 %v549, %v556
  %v558 = vmul.f32 %v557, 1.442695
  %v559 = vpow.pop %v558
  %v560 = vsub.f32 %v555, %v556
  %v561 = vmul.f32 %v560, 1.442695
  %v562 = vpow.pop %v561
  %v563 = vadd.f32 %v559, %v562
  %v564 = vrcp.pop %v563
  %v565 = vmul.f32 %v559, %v564
  %v566 = vmul.f32 %v565, %v544
  %v567 = vmul.f32 %v562, %v564
  %v568 = vmul.f32 %v567, %v551
  %v569 = vadd.f32 %v566, %v568
  %v570 = vpack.c.bf16 %v569, %v569
  %v571 = vld [vmem:[%s5] sm:$0xf]
  %v572 = vld [vmem:[%s5 + $0x4] sm:$0xf]
  %v573 = vld [vmem:[%s5 + $0x8] sm:$0xf]
  %v574 = vld [vmem:[%s5 + $0xc] sm:$0xf]
  %v575 = vld [vmem:[%s5 + $0x10] sm:$0xf]
  %v576 = vld [vmem:[%s5 + $0x14] sm:$0xf]
  %v577 = vld [vmem:[%s5 + $0x18] sm:$0xf]
  %v578 = vld [vmem:[%s5 + $0x1c] sm:$0xf]
  %v579 = vld [vmem:[%s5 + $0x20] sm:$0xf]
  %v580 = vld [vmem:[%s5 + $0x24] sm:$0xf]
  %v581 = vld [vmem:[%s5 + $0x28] sm:$0xf]
  %v582 = vld [vmem:[%s5 + $0x2c] sm:$0xf]
  %v583 = vld [vmem:[%s5 + $0x30] sm:$0xf]
  %v584 = vld [vmem:[%s5 + $0x34] sm:$0xf]
  %v585 = vld [vmem:[%s5 + $0x38] sm:$0xf]
  %v586 = vld [vmem:[%s5 + $0x3c] sm:$0xf]
  %v587 = vld [vmem:[%s6] sm:$0x1]
  %v589 = vperm.slane %v587, 0
  %v607 = vunpack.c.l.b16 %v571
  %v608 = vunpack.c.l.b16 %v572
  %v609 = vunpack.c.l.b16 %v573
  %v610 = vunpack.c.l.b16 %v574
  %v611 = vunpack.c.l.b16 %v575
  %v612 = vunpack.c.l.b16 %v576
  %v613 = vunpack.c.l.b16 %v577
  %v614 = vunpack.c.l.b16 %v578
  %v615 = vunpack.c.l.b16 %v579
  %v616 = vunpack.c.l.b16 %v580
  %v617 = vunpack.c.l.b16 %v581
  %v618 = vunpack.c.l.b16 %v582
  %v619 = vunpack.c.l.b16 %v583
  %v620 = vunpack.c.l.b16 %v584
  %v621 = vunpack.c.l.b16 %v585
  %v622 = vunpack.c.l.b16 %v586
  %v623 = vpack.c.b16 %v608, %v607
  %v624 = vpack.c.b16 %v610, %v609
  %v625 = vpack.c.b16 %v612, %v611
  %v626 = vpack.c.b16 %v614, %v613
  %v627 = vpack.c.b16 %v616, %v615
  %v628 = vpack.c.b16 %v618, %v617
  %v629 = vpack.c.b16 %v620, %v619
  %v630 = vpack.c.b16 %v622, %v621
  %639 = vmatpush.bf16.msra.mxu0 %v630
  %640 = vmatpush.bf16.msra.mxu0 %v629
  %641 = vmatpush.bf16.msra.mxu0 %v628
  %642 = vmatpush.bf16.msra.mxu0 %v627
  %643 = vmatpush.bf16.msra.mxu0 %v626
  %644 = vmatpush.bf16.msra.mxu0 %v625
  %645 = vmatpush.bf16.msra.mxu0 %v624
  %646 = vmatpush.bf16.msra.mxu0 %v623
  %647 = vmatmul.bf16.gmra.mxu0 %v570
  %v648 = vpop.f32.mrf.mxu0
  %v649 = vadd.f32 %v589, %v648
  %v650 = vpop.f32.mrf.mxu0
  %651 = vdwg.mxu0
  %v652 = vld [vmem:[%s0] sm:$0x1f]
  %v653 = vadd.f32 %v649, %v652
  %v654 = vld [vmem:[%s7] sm:$0x1]
  %v655 = vld [vmem:[%s8] sm:$0x1]
  %v656 = vsel %vm47, %v653, 0.0
  %657 = vadd.xlane.f32.xlu0 %v656
  %v658 = vpop.xlane.xlu0 %657
  %v659 = vmul.f32 %v658, %v57
  %v660 = vsub.f32 %v653, %v659
  %v661 = vmul.f32 %v660, %v660
  %v662 = vsel %vm47, %v661, 0.0
  %663 = vadd.xlane.f32.xlu0 %v662
  %v664 = vpop.xlane.xlu0 %663
  %v665 = vmul.f32 %v664, %v57
  %v666 = vadd.f32 %v665, 1e-05
  %v667 = vrsqrt.pop %v666
  %v668 = vmul.f32 %v667, %v666
  %v669 = vmul.f32 %v668, %v667
  %v670 = vmul.f32 0.5, %v669
  %v671 = vsub.f32 1.5, %v670
  %v672 = vmul.f32 %v667, %v671
  %vm673 = vweird.f32 %v666
  %vm674 = vweird.f32 %v667
  %vm675 = vmor %vm673, %vm674
  %v676 = vsel %vm675, %v667, %v672
  %v677 = vmul.f32 %v660, %v676
  %v679 = vperm.slane %v654, 0
  %v681 = vmul.f32 %v677, %v679
  %v683 = vperm.slane %v655, 0
  %v685 = vadd.f32 %v681, %v683
  %v686 = vpack.c.bf16 %v685, %v685
  %v687 = vld [vmem:[%s9] sm:$0xff]
  %v688 = vld [vmem:[%s9 + $0x8] sm:$0xff]
  %v689 = vld [vmem:[%s9 + $0x10] sm:$0xff]
  %v690 = vld [vmem:[%s9 + $0x18] sm:$0xff]
  %v691 = vld [vmem:[%s9 + $0x20] sm:$0xff]
  %v692 = vld [vmem:[%s9 + $0x28] sm:$0xff]
  %v693 = vld [vmem:[%s9 + $0x30] sm:$0xff]
  %v694 = vld [vmem:[%s9 + $0x38] sm:$0xff]
  %v695 = vld [vmem:[%s9 + $0x40] sm:$0xff]
  %v696 = vld [vmem:[%s9 + $0x48] sm:$0xff]
  %v697 = vld [vmem:[%s9 + $0x50] sm:$0xff]
  %v698 = vld [vmem:[%s9 + $0x58] sm:$0xff]
  %v699 = vld [vmem:[%s9 + $0x60] sm:$0xff]
  %v700 = vld [vmem:[%s9 + $0x68] sm:$0xff]
  %v701 = vld [vmem:[%s9 + $0x70] sm:$0xff]
  %v702 = vld [vmem:[%s9 + $0x78] sm:$0xff]
  %v703 = vld [vmem:[%s10] sm:$0x3]
  %v705 = vperm.slane %v703, 0
  %v706 = vperm.slane %v703, 1
  %v725 = vunpack.c.l.b16 %v687
  %v726 = vunpack.c.h.b16 %v687
  %v727 = vunpack.c.l.b16 %v688
  %v728 = vunpack.c.h.b16 %v688
  %v729 = vunpack.c.l.b16 %v689
  %v730 = vunpack.c.h.b16 %v689
  %v731 = vunpack.c.l.b16 %v690
  %v732 = vunpack.c.h.b16 %v690
  %v733 = vunpack.c.l.b16 %v691
  %v734 = vunpack.c.h.b16 %v691
  %v735 = vunpack.c.l.b16 %v692
  %v736 = vunpack.c.h.b16 %v692
  %v737 = vunpack.c.l.b16 %v693
  %v738 = vunpack.c.h.b16 %v693
  %v739 = vunpack.c.l.b16 %v694
  %v740 = vunpack.c.h.b16 %v694
  %v741 = vunpack.c.l.b16 %v695
  %v742 = vunpack.c.h.b16 %v695
  %v743 = vunpack.c.l.b16 %v696
  %v744 = vunpack.c.h.b16 %v696
  %v745 = vunpack.c.l.b16 %v697
  %v746 = vunpack.c.h.b16 %v697
  %v747 = vunpack.c.l.b16 %v698
  %v748 = vunpack.c.h.b16 %v698
  %v749 = vunpack.c.l.b16 %v699
  %v750 = vunpack.c.h.b16 %v699
  %v751 = vunpack.c.l.b16 %v700
  %v752 = vunpack.c.h.b16 %v700
  %v753 = vunpack.c.l.b16 %v701
  %v754 = vunpack.c.h.b16 %v701
  %v755 = vunpack.c.l.b16 %v702
  %v756 = vunpack.c.h.b16 %v702
  %v757 = vpack.c.b16 %v727, %v725
  %v758 = vpack.c.b16 %v728, %v726
  %v759 = vpack.c.b16 %v731, %v729
  %v760 = vpack.c.b16 %v732, %v730
  %v761 = vpack.c.b16 %v735, %v733
  %v762 = vpack.c.b16 %v736, %v734
  %v763 = vpack.c.b16 %v739, %v737
  %v764 = vpack.c.b16 %v740, %v738
  %v765 = vpack.c.b16 %v743, %v741
  %v766 = vpack.c.b16 %v744, %v742
  %v767 = vpack.c.b16 %v747, %v745
  %v768 = vpack.c.b16 %v748, %v746
  %v769 = vpack.c.b16 %v751, %v749
  %v770 = vpack.c.b16 %v752, %v750
  %v771 = vpack.c.b16 %v755, %v753
  %v772 = vpack.c.b16 %v756, %v754
  %789 = vmatpush.bf16.msra.mxu0 %v771
  %790 = vmatpush.bf16.msra.mxu0 %v769
  %791 = vmatpush.bf16.msra.mxu0 %v767
  %792 = vmatpush.bf16.msra.mxu0 %v765
  %793 = vmatpush.bf16.msra.mxu0 %v763
  %794 = vmatpush.bf16.msra.mxu0 %v761
  %795 = vmatpush.bf16.msra.mxu0 %v759
  %796 = vmatpush.bf16.msra.mxu0 %v757
  %797 = vmatmul.bf16.gmra.mxu0 %v686
  %v798 = vpop.f32.mrf.mxu0
  %v799 = vadd.f32 %v705, %v798
  %v800 = vpop.f32.mrf.mxu0
  %801 = vdwg.mxu0
  %802 = vmatpush.bf16.msra.mxu0 %v772
  %803 = vmatpush.bf16.msra.mxu0 %v770
  %804 = vmatpush.bf16.msra.mxu0 %v768
  %805 = vmatpush.bf16.msra.mxu0 %v766
  %806 = vmatpush.bf16.msra.mxu0 %v764
  %807 = vmatpush.bf16.msra.mxu0 %v762
  %808 = vmatpush.bf16.msra.mxu0 %v760
  %809 = vmatpush.bf16.msra.mxu0 %v758
  %810 = vmatmul.bf16.gmra.mxu0 %v686
  %v811 = vpop.f32.mrf.mxu0
  %v812 = vadd.f32 %v706, %v811
  %v813 = vpop.f32.mrf.mxu0
  %814 = vdwg.mxu0
  %v815 = vmul.f32 %v799, 0.5
  %v816 = vmul.f32 %v812, 0.5
  %v817 = vmul.f32 %v799, 0.70710677
  %v818 = vmul.f32 %v812, 0.70710677
  %v819 = vmul.f32 %v817, %v817
  %v820 = vmin.f32 16.0, %v819
  %v821 = vmul.f32 %v820, 2.1237322e-06
  %v822 = vadd.f32 %v821, 0.00028619796
  %v823 = vmul.f32 %v820, %v822
  %v824 = vadd.f32 %v823, 0.0036580483
  %v825 = vmul.f32 %v820, %v824
  %v826 = vadd.f32 %v825, 0.05243302
  %v827 = vmul.f32 %v820, %v826
  %v828 = vadd.f32 %v827, 0.18741608
  %v829 = vmul.f32 %v820, %v828
  %v830 = vadd.f32 %v829, 1.1283791
  %v831 = vmul.f32 %v817, %v830
  %v832 = vmul.f32 %v820, 3.8918573e-05
  %v833 = vadd.f32 %v832, 0.001143296
  %v834 = vmul.f32 %v820, %v833
  %v835 = vadd.f32 %v834, 0.014752088
  %v836 = vmul.f32 %v820, %v835
  %v837 = vadd.f32 %v836, 0.112945676
  %v838 = vmul.f32 %v820, %v837
  %v839 = vadd.f32 %v838, 0.4994258
  %v840 = vmul.f32 %v820, %v839
  %v841 = vadd.f32 %v840, 1.0
  %v842 = vrcp.pop %v841
  %v843 = vmul.f32 %v841, %v842
  %v844 = vsub.f32 1.0, %v843
  %v845 = vmul.f32 %v842, %v844
  %v846 = vadd.f32 %v842, %v845
  %vm847 = vweird.f32 %v841
  %vm848 = vweird.f32 %v842
  %vm849 = vmor %vm847, %vm848
  %v850 = vsel %vm849, %v842, %v846
  %v851 = vand.u32 2147483647, %v841
  %vm852 = vcmp.eq.f32.partialorder %v851, 8.507059e+37
  %v853 = vand.u32 %v841, 2147483648
  %v854 = vor.u32 1.1754944e-38, %v853
  %v855 = vsel %vm852, %v854, %v850
  %v856 = vmul.f32 %v831, %v855
  %v857 = vmin.f32 %v856, 1.0
  %v858 = vmax.f32 %v857, -1.0
  %v859 = vmul.f32 %v818, %v818
  %v860 = vmin.f32 16.0, %v859
  %v861 = vmul.f32 %v860, 2.1237322e-06
  %v862 = vadd.f32 %v861, 0.00028619796
  %v863 = vmul.f32 %v860, %v862
  %v864 = vadd.f32 %v863, 0.0036580483
  %v865 = vmul.f32 %v860, %v864
  %v866 = vadd.f32 %v865, 0.05243302
  %v867 = vmul.f32 %v860, %v866
  %v868 = vadd.f32 %v867, 0.18741608
  %v869 = vmul.f32 %v860, %v868
  %v870 = vadd.f32 %v869, 1.1283791
  %v871 = vmul.f32 %v818, %v870
  %v872 = vmul.f32 %v860, 3.8918573e-05
  %v873 = vadd.f32 %v872, 0.001143296
  %v874 = vmul.f32 %v860, %v873
  %v875 = vadd.f32 %v874, 0.014752088
  %v876 = vmul.f32 %v860, %v875
  %v877 = vadd.f32 %v876, 0.112945676
  %v878 = vmul.f32 %v860, %v877
  %v879 = vadd.f32 %v878, 0.4994258
  %v880 = vmul.f32 %v860, %v879
  %v881 = vadd.f32 %v880, 1.0
  %v882 = vrcp.pop %v881
  %v883 = vmul.f32 %v881, %v882
  %v884 = vsub.f32 1.0, %v883
  %v885 = vmul.f32 %v882, %v884
  %v886 = vadd.f32 %v882, %v885
  %vm887 = vweird.f32 %v881
  %vm888 = vweird.f32 %v882
  %vm889 = vmor %vm887, %vm888
  %v890 = vsel %vm889, %v882, %v886
  %v891 = vand.u32 2147483647, %v881
  %vm892 = vcmp.eq.f32.partialorder %v891, 8.507059e+37
  %v893 = vand.u32 %v881, 2147483648
  %v894 = vor.u32 1.1754944e-38, %v893
  %v895 = vsel %vm892, %v894, %v890
  %v896 = vmul.f32 %v871, %v895
  %v897 = vmin.f32 %v896, 1.0
  %v898 = vmax.f32 %v897, -1.0
  %v899 = vadd.f32 %v858, 1.0
  %v900 = vadd.f32 %v898, 1.0
  %v901 = vmul.f32 %v815, %v899
  %v902 = vmul.f32 %v816, %v900
  %v903 = vpack.c.bf16 %v901, %v901
  %v904 = vpack.c.bf16 %v902, %v902
  %v905 = vld [vmem:[%s11] sm:$0xf]
  %v906 = vld [vmem:[%s11 + $0x4] sm:$0xf]
  %v907 = vld [vmem:[%s11 + $0x8] sm:$0xf]
  %v908 = vld [vmem:[%s11 + $0xc] sm:$0xf]
  %v909 = vld [vmem:[%s11 + $0x10] sm:$0xf]
  %v910 = vld [vmem:[%s11 + $0x14] sm:$0xf]
  %v911 = vld [vmem:[%s11 + $0x18] sm:$0xf]
  %v912 = vld [vmem:[%s11 + $0x1c] sm:$0xf]
  %v913 = vld [vmem:[%s11 + $0x20] sm:$0xf]
  %v914 = vld [vmem:[%s11 + $0x24] sm:$0xf]
  %v915 = vld [vmem:[%s11 + $0x28] sm:$0xf]
  %v916 = vld [vmem:[%s11 + $0x2c] sm:$0xf]
  %v917 = vld [vmem:[%s11 + $0x30] sm:$0xf]
  %v918 = vld [vmem:[%s11 + $0x34] sm:$0xf]
  %v919 = vld [vmem:[%s11 + $0x38] sm:$0xf]
  %v920 = vld [vmem:[%s11 + $0x3c] sm:$0xf]
  %v921 = vld [vmem:[%s11 + $0x40] sm:$0xf]
  %v922 = vld [vmem:[%s11 + $0x44] sm:$0xf]
  %v923 = vld [vmem:[%s11 + $0x48] sm:$0xf]
  %v924 = vld [vmem:[%s11 + $0x4c] sm:$0xf]
  %v925 = vld [vmem:[%s11 + $0x50] sm:$0xf]
  %v926 = vld [vmem:[%s11 + $0x54] sm:$0xf]
  %v927 = vld [vmem:[%s11 + $0x58] sm:$0xf]
  %v928 = vld [vmem:[%s11 + $0x5c] sm:$0xf]
  %v929 = vld [vmem:[%s11 + $0x60] sm:$0xf]
  %v930 = vld [vmem:[%s11 + $0x64] sm:$0xf]
  %v931 = vld [vmem:[%s11 + $0x68] sm:$0xf]
  %v932 = vld [vmem:[%s11 + $0x6c] sm:$0xf]
  %v933 = vld [vmem:[%s11 + $0x70] sm:$0xf]
  %v934 = vld [vmem:[%s11 + $0x74] sm:$0xf]
  %v935 = vld [vmem:[%s11 + $0x78] sm:$0xf]
  %v936 = vld [vmem:[%s11 + $0x7c] sm:$0xf]
  %v937 = vld [vmem:[%s12] sm:$0x1]
  %v939 = vperm.slane %v937, 0
  %v973 = vunpack.c.l.b16 %v905
  %v974 = vunpack.c.l.b16 %v906
  %v975 = vunpack.c.l.b16 %v907
  %v976 = vunpack.c.l.b16 %v908
  %v977 = vunpack.c.l.b16 %v909
  %v978 = vunpack.c.l.b16 %v910
  %v979 = vunpack.c.l.b16 %v911
  %v980 = vunpack.c.l.b16 %v912
  %v981 = vunpack.c.l.b16 %v913
  %v982 = vunpack.c.l.b16 %v914
  %v983 = vunpack.c.l.b16 %v915
  %v984 = vunpack.c.l.b16 %v916
  %v985 = vunpack.c.l.b16 %v917
  %v986 = vunpack.c.l.b16 %v918
  %v987 = vunpack.c.l.b16 %v919
  %v988 = vunpack.c.l.b16 %v920
  %v989 = vunpack.c.l.b16 %v921
  %v990 = vunpack.c.l.b16 %v922
  %v991 = vunpack.c.l.b16 %v923
  %v992 = vunpack.c.l.b16 %v924
  %v993 = vunpack.c.l.b16 %v925
  %v994 = vunpack.c.l.b16 %v926
  %v995 = vunpack.c.l.b16 %v927
  %v996 = vunpack.c.l.b16 %v928
  %v997 = vunpack.c.l.b16 %v929
  %v998 = vunpack.c.l.b16 %v930
  %v999 = vunpack.c.l.b16 %v931
  %v1000 = vunpack.c.l.b16 %v932
  %v1001 = vunpack.c.l.b16 %v933
  %v1002 = vunpack.c.l.b16 %v934
  %v1003 = vunpack.c.l.b16 %v935
  %v1004 = vunpack.c.l.b16 %v936
  %v1005 = vpack.c.b16 %v974, %v973
  %v1006 = vpack.c.b16 %v976, %v975
  %v1007 = vpack.c.b16 %v978, %v977
  %v1008 = vpack.c.b16 %v980, %v979
  %v1009 = vpack.c.b16 %v982, %v981
  %v1010 = vpack.c.b16 %v984, %v983
  %v1011 = vpack.c.b16 %v986, %v985
  %v1012 = vpack.c.b16 %v988, %v987
  %v1013 = vpack.c.b16 %v990, %v989
  %v1014 = vpack.c.b16 %v992, %v991
  %v1015 = vpack.c.b16 %v994, %v993
  %v1016 = vpack.c.b16 %v996, %v995
  %v1017 = vpack.c.b16 %v998, %v997
  %v1018 = vpack.c.b16 %v1000, %v999
  %v1019 = vpack.c.b16 %v1002, %v1001
  %v1020 = vpack.c.b16 %v1004, %v1003
  %1037 = vmatpush.bf16.msra.mxu0 %v1012
  %1038 = vmatpush.bf16.msra.mxu0 %v1011
  %1039 = vmatpush.bf16.msra.mxu0 %v1010
  %1040 = vmatpush.bf16.msra.mxu0 %v1009
  %1041 = vmatpush.bf16.msra.mxu0 %v1008
  %1042 = vmatpush.bf16.msra.mxu0 %v1007
  %1043 = vmatpush.bf16.msra.mxu0 %v1006
  %1044 = vmatpush.bf16.msra.mxu0 %v1005
  %1045 = vmatmul.bf16.gmra.mxu0 %v903
  %v1046 = vpop.f32.mrf.mxu0
  %v1047 = vadd.f32 %v939, %v1046
  %v1048 = vpop.f32.mrf.mxu0
  %1049 = vdwg.mxu0
  %1050 = vmatpush.bf16.msra.mxu0 %v1020
  %1051 = vmatpush.bf16.msra.mxu0 %v1019
  %1052 = vmatpush.bf16.msra.mxu0 %v1018
  %1053 = vmatpush.bf16.msra.mxu0 %v1017
  %1054 = vmatpush.bf16.msra.mxu0 %v1016
  %1055 = vmatpush.bf16.msra.mxu0 %v1015
  %1056 = vmatpush.bf16.msra.mxu0 %v1014
  %1057 = vmatpush.bf16.msra.mxu0 %v1013
  %1058 = vmatmul.bf16.gmra.mxu0 %v904
  %v1059 = vpop.f32.mrf.mxu0
  %v1060 = vadd.f32 %v1047, %v1059
  %v1061 = vpop.f32.mrf.mxu0
  %1062 = vdwg.mxu0
  %v1063 = vadd.f32 %v653, %v1060
  %1064 = vst [vmem:[%s13] sm:$0x1f] %v1063
  %v1065 = vld [vmem:[%s538] sm:$0x1f]
  %v1066 = vld [vmem:[%s538 + $0x8] sm:$0x1f]
  %v1067 = vld [vmem:[%s538 + $0x10] sm:$0x1f]
  %v1068 = vmul.f32 %v1065, 0.088388346
  %v1069 = vld [vmem:[#allocation2 + $0x8] sm:$0x1f]
  %v1070 = vld [vmem:[#allocation2 + $0x10] sm:$0x1f]
  %v1071 = vmul.f32 %v1068, %v1069
  %v1072 = vsel %vm47, %v1071, 0.0
  %1073 = vadd.xlane.f32.xlu0 %v1072
  %v1074 = vpop.xlane.xlu0 %1073
  %v1075 = vmul.f32 %v1068, %v1066
  %v1076 = vsel %vm47, %v1075, 0.0
  %1077 = vadd.xlane.f32.xlu0 %v1076
  %v1078 = vpop.xlane.xlu0 %1077
  %v1079 = vmax.f32 %v1074, %v1078
  %v1080 = vsub.f32 %v1074, %v1079
  %v1081 = vmul.f32 %v1080, 1.442695
  %v1082 = vpow.pop %v1081
  %v1083 = vsub.f32 %v1078, %v1079
  %v1084 = vmul.f32 %v1083, 1.442695
  %v1085 = vpow.pop %v1084
  %v1086 = vadd.f32 %v1082, %v1085
  %v1087 = vrcp.pop %v1086
  %v1088 = vmul.f32 %v1082, %v1087
  %v1089 = vmul.f32 %v1088, %v1070
  %v1090 = vmul.f32 %v1085, %v1087
  %v1091 = vmul.f32 %v1090, %v1067
  %v1092 = vadd.f32 %v1089, %v1091
  %v1093 = vpack.c.bf16 %v1092, %v1092
  %v1094 = vld [vmem:[%s5] sm:$0xf]
  %v1095 = vld [vmem:[%s5 + $0x4] sm:$0xf]
  %v1096 = vld [vmem:[%s5 + $0x8] sm:$0xf]
  %v1097 = vld [vmem:[%s5 + $0xc] sm:$0xf]
  %v1098 = vld [vmem:[%s5 + $0x10] sm:$0xf]
  %v1099 = vld [vmem:[%s5 + $0x14] sm:$0xf]
  %v1100 = vld [vmem:[%s5 + $0x18] sm:$0xf]
  %v1101 = vld [vmem:[%s5 + $0x1c] sm:$0xf]
  %v1102 = vld [vmem:[%s5 + $0x20] sm:$0xf]
  %v1103 = vld [vmem:[%s5 + $0x24] sm:$0xf]
  %v1104 = vld [vmem:[%s5 + $0x28] sm:$0xf]
  %v1105 = vld [vmem:[%s5 + $0x2c] sm:$0xf]
  %v1106 = vld [vmem:[%s5 + $0x30] sm:$0xf]
  %v1107 = vld [vmem:[%s5 + $0x34] sm:$0xf]
  %v1108 = vld [vmem:[%s5 + $0x38] sm:$0xf]
  %v1109 = vld [vmem:[%s5 + $0x3c] sm:$0xf]
  %v1110 = vld [vmem:[%s6] sm:$0x1]
  %v1112 = vperm.slane %v1110, 0
  %v1130 = vunpack.c.l.b16 %v1094
  %v1131 = vunpack.c.l.b16 %v1095
  %v1132 = vunpack.c.l.b16 %v1096
  %v1133 = vunpack.c.l.b16 %v1097
  %v1134 = vunpack.c.l.b16 %v1098
  %v1135 = vunpack.c.l.b16 %v1099
  %v1136 = vunpack.c.l.b16 %v1100
  %v1137 = vunpack.c.l.b16 %v1101
  %v1138 = vunpack.c.l.b16 %v1102
  %v1139 = vunpack.c.l.b16 %v1103
  %v1140 = vunpack.c.l.b16 %v1104
  %v1141 = vunpack.c.l.b16 %v1105
  %v1142 = vunpack.c.l.b16 %v1106
  %v1143 = vunpack.c.l.b16 %v1107
  %v1144 = vunpack.c.l.b16 %v1108
  %v1145 = vunpack.c.l.b16 %v1109
  %v1146 = vpack.c.b16 %v1131, %v1130
  %v1147 = vpack.c.b16 %v1133, %v1132
  %v1148 = vpack.c.b16 %v1135, %v1134
  %v1149 = vpack.c.b16 %v1137, %v1136
  %v1150 = vpack.c.b16 %v1139, %v1138
  %v1151 = vpack.c.b16 %v1141, %v1140
  %v1152 = vpack.c.b16 %v1143, %v1142
  %v1153 = vpack.c.b16 %v1145, %v1144
  %1162 = vmatpush.bf16.msra.mxu0 %v1153
  %1163 = vmatpush.bf16.msra.mxu0 %v1152
  %1164 = vmatpush.bf16.msra.mxu0 %v1151
  %1165 = vmatpush.bf16.msra.mxu0 %v1150
  %1166 = vmatpush.bf16.msra.mxu0 %v1149
  %1167 = vmatpush.bf16.msra.mxu0 %v1148
  %1168 = vmatpush.bf16.msra.mxu0 %v1147
  %1169 = vmatpush.bf16.msra.mxu0 %v1146
  %1170 = vmatmul.bf16.gmra.mxu0 %v1093
  %v1171 = vpop.f32.mrf.mxu0
  %v1172 = vadd.f32 %v1112, %v1171
  %v1173 = vpop.f32.mrf.mxu0
  %1174 = vdwg.mxu0
  %v1175 = vld [vmem:[%s296] sm:$0x1f]
  %v1176 = vadd.f32 %v1172, %v1175
  %v1177 = vld [vmem:[%s7] sm:$0x1]
  %v1178 = vld [vmem:[%s8] sm:$0x1]
  %v1179 = vsel %vm47, %v1176, 0.0
  %1180 = vadd.xlane.f32.xlu0 %v1179
  %v1181 = vpop.xlane.xlu0 %1180
  %v1182 = vmul.f32 %v1181, %v57
  %v1183 = vsub.f32 %v1176, %v1182
  %v1184 = vmul.f32 %v1183, %v1183
  %v1185 = vsel %vm47, %v1184, 0.0
  %1186 = vadd.xlane.f32.xlu0 %v1185
  %v1187 = vpop.xlane.xlu0 %1186
  %v1188 = vmul.f32 %v1187, %v57
  %v1189 = vadd.f32 %v1188, 1e-05
  %v1190 = vrsqrt.pop %v1189
  %v1191 = vmul.f32 %v1190, %v1189
  %v1192 = vmul.f32 %v1191, %v1190
  %v1193 = vmul.f32 0.5, %v1192
  %v1194 = vsub.f32 1.5, %v1193
  %v1195 = vmul.f32 %v1190, %v1194
  %vm1196 = vweird.f32 %v1189
  %vm1197 = vweird.f32 %v1190
  %vm1198 = vmor %vm1196, %vm1197
  %v1199 = vsel %vm1198, %v1190, %v1195
  %v1200 = vmul.f32 %v1183, %v1199
  %v1202 = vperm.slane %v1177, 0
  %v1204 = vmul.f32 %v1200, %v1202
  %v1206 = vperm.slane %v1178, 0
  %v1208 = vadd.f32 %v1204, %v1206
  %v1209 = vpack.c.bf16 %v1208, %v1208
  %v1210 = vld [vmem:[%s9] sm:$0xff]
  %v1211 = vld [vmem:[%s9 + $0x8] sm:$0xff]
  %v1212 = vld [vmem:[%s9 + $0x10] sm:$0xff]
  %v1213 = vld [vmem:[%s9 + $0x18] sm:$0xff]
  %v1214 = vld [vmem:[%s9 + $0x20] sm:$0xff]
  %v1215 = vld [vmem:[%s9 + $0x28] sm:$0xff]
  %v1216 = vld [vmem:[%s9 + $0x30] sm:$0xff]
  %v1217 = vld [vmem:[%s9 + $0x38] sm:$0xff]
  %v1218 = vld [vmem:[%s9 + $0x40] sm:$0xff]
  %v1219 = vld [vmem:[%s9 + $0x48] sm:$0xff]
  %v1220 = vld [vmem:[%s9 + $0x50] sm:$0xff]
  %v1221 = vld [vmem:[%s9 + $0x58] sm:$0xff]
  %v1222 = vld [vmem:[%s9 + $0x60] sm:$0xff]
  %v1223 = vld [vmem:[%s9 + $0x68] sm:$0xff]
  %v1224 = vld [vmem:[%s9 + $0x70] sm:$0xff]
  %v1225 = vld [vmem:[%s9 + $0x78] sm:$0xff]
  %v1226 = vld [vmem:[%s10] sm:$0x3]
  %v1228 = vperm.slane %v1226, 0
  %v1229 = vperm.slane %v1226, 1
  %v1248 = vunpack.c.l.b16 %v1210
  %v1249 = vunpack.c.h.b16 %v1210
  %v1250 = vunpack.c.l.b16 %v1211
  %v1251 = vunpack.c.h.b16 %v1211
  %v1252 = vunpack.c.l.b16 %v1212
  %v1253 = vunpack.c.h.b16 %v1212
  %v1254 = vunpack.c.l.b16 %v1213
  %v1255 = vunpack.c.h.b16 %v1213
  %v1256 = vunpack.c.l.b16 %v1214
  %v1257 = vunpack.c.h.b16 %v1214
  %v1258 = vunpack.c.l.b16 %v1215
  %v1259 = vunpack.c.h.b16 %v1215
  %v1260 = vunpack.c.l.b16 %v1216
  %v1261 = vunpack.c.h.b16 %v1216
  %v1262 = vunpack.c.l.b16 %v1217
  %v1263 = vunpack.c.h.b16 %v1217
  %v1264 = vunpack.c.l.b16 %v1218
  %v1265 = vunpack.c.h.b16 %v1218
  %v1266 = vunpack.c.l.b16 %v1219
  %v1267 = vunpack.c.h.b16 %v1219
  %v1268 = vunpack.c.l.b16 %v1220
  %v1269 = vunpack.c.h.b16 %v1220
  %v1270 = vunpack.c.l.b16 %v1221
  %v1271 = vunpack.c.h.b16 %v1221
  %v1272 = vunpack.c.l.b16 %v1222
  %v1273 = vunpack.c.h.b16 %v1222
  %v1274 = vunpack.c.l.b16 %v1223
  %v1275 = vunpack.c.h.b16 %v1223
  %v1276 = vunpack.c.l.b16 %v1224
  %v1277 = vunpack.c.h.b16 %v1224
  %v1278 = vunpack.c.l.b16 %v1225
  %v1279 = vunpack.c.h.b16 %v1225
  %v1280 = vpack.c.b16 %v1250, %v1248
  %v1281 = vpack.c.b16 %v1251, %v1249
  %v1282 = vpack.c.b16 %v1254, %v1252
  %v1283 = vpack.c.b16 %v1255, %v1253
  %v1284 = vpack.c.b16 %v1258, %v1256
  %v1285 = vpack.c.b16 %v1259, %v1257
  %v1286 = vpack.c.b16 %v1262, %v1260
  %v1287 = vpack.c.b16 %v1263, %v1261
  %v1288 = vpack.c.b16 %v1266, %v1264
  %v1289 = vpack.c.b16 %v1267, %v1265
  %v1290 = vpack.c.b16 %v1270, %v1268
  %v1291 = vpack.c.b16 %v1271, %v1269
  %v1292 = vpack.c.b16 %v1274, %v1272
  %v1293 = vpack.c.b16 %v1275, %v1273
  %v1294 = vpack.c.b16 %v1278, %v1276
  %v1295 = vpack.c.b16 %v1279, %v1277
  %1312 = vmatpush.bf16.msra.mxu0 %v1294
  %1313 = vmatpush.bf16.msra.mxu0 %v1292
  %1314 = vmatpush.bf16.msra.mxu0 %v1290
  %1315 = vmatpush.bf16.msra.mxu0 %v1288
  %1316 = vmatpush.bf16.msra.mxu0 %v1286
  %1317 = vmatpush.bf16.msra.mxu0 %v1284
  %1318 = vmatpush.bf16.msra.mxu0 %v1282
  %1319 = vmatpush.bf16.msra.mxu0 %v1280
  %1320 = vmatmul.bf16.gmra.mxu0 %v1209
  %v1321 = vpop.f32.mrf.mxu0
  %v1322 = vadd.f32 %v1228, %v1321
  %v1323 = vpop.f32.mrf.mxu0
  %1324 = vdwg.mxu0
  %1325 = vmatpush.bf16.msra.mxu0 %v1295
  %1326 = vmatpush.bf16.msra.mxu0 %v1293
  %1327 = vmatpush.bf16.msra.mxu0 %v1291
  %1328 = vmatpush.bf16.msra.mxu0 %v1289
  %1329 = vmatpush.bf16.msra.mxu0 %v1287
  %1330 = vmatpush.bf16.msra.mxu0 %v1285
  %1331 = vmatpush.bf16.msra.mxu0 %v1283
  %1332 = vmatpush.bf16.msra.mxu0 %v1281
  %1333 = vmatmul.bf16.gmra.mxu0 %v1209
  %v1334 = vpop.f32.mrf.mxu0
  %v1335 = vadd.f32 %v1229, %v1334
  %v1336 = vpop.f32.mrf.mxu0
  %1337 = vdwg.mxu0
  %v1338 = vmul.f32 %v1322, 0.5
  %v1339 = vmul.f32 %v1335, 0.5
  %v1340 = vmul.f32 %v1322, 0.70710677
  %v1341 = vmul.f32 %v1335, 0.70710677
  %v1342 = vmul.f32 %v1340, %v1340
  %v1343 = vmin.f32 16.0, %v1342
  %v1344 = vmul.f32 %v1343, 2.1237322e-06
  %v1345 = vadd.f32 %v1344, 0.00028619796
  %v1346 = vmul.f32 %v1343, %v1345
  %v1347 = vadd.f32 %v1346, 0.0036580483
  %v1348 = vmul.f32 %v1343, %v1347
  %v1349 = vadd.f32 %v1348, 0.05243302
  %v1350 = vmul.f32 %v1343, %v1349
  %v1351 = vadd.f32 %v1350, 0.18741608
  %v1352 = vmul.f32 %v1343, %v1351
  %v1353 = vadd.f32 %v1352, 1.1283791
  %v1354 = vmul.f32 %v1340, %v1353
  %v1355 = vmul.f32 %v1343, 3.8918573e-05
  %v1356 = vadd.f32 %v1355, 0.001143296
  %v1357 = vmul.f32 %v1343, %v1356
  %v1358 = vadd.f32 %v1357, 0.014752088
  %v1359 = vmul.f32 %v1343, %v1358
  %v1360 = vadd.f32 %v1359, 0.112945676
  %v1361 = vmul.f32 %v1343, %v1360
  %v1362 = vadd.f32 %v1361, 0.4994258
  %v1363 = vmul.f32 %v1343, %v1362
  %v1364 = vadd.f32 %v1363, 1.0
  %v1365 = vrcp.pop %v1364
  %v1366 = vmul.f32 %v1364, %v1365
  %v1367 = vsub.f32 1.0, %v1366
  %v1368 = vmul.f32 %v1365, %v1367
  %v1369 = vadd.f32 %v1365, %v1368
  %vm1370 = vweird.f32 %v1364
  %vm1371 = vweird.f32 %v1365
  %vm1372 = vmor %vm1370, %vm1371
  %v1373 = vsel %vm1372, %v1365, %v1369
  %v1374 = vand.u32 2147483647, %v1364
  %vm1375 = vcmp.eq.f32.partialorder %v1374, 8.507059e+37
  %v1376 = vand.u32 %v1364, 2147483648
  %v1377 = vor.u32 1.1754944e-38, %v1376
  %v1378 = vsel %vm1375, %v1377, %v1373
  %v1379 = vmul.f32 %v1354, %v1378
  %v1380 = vmin.f32 %v1379, 1.0
  %v1381 = vmax.f32 %v1380, -1.0
  %v1382 = vmul.f32 %v1341, %v1341
  %v1383 = vmin.f32 16.0, %v1382
  %v1384 = vmul.f32 %v1383, 2.1237322e-06
  %v1385 = vadd.f32 %v1384, 0.00028619796
  %v1386 = vmul.f32 %v1383, %v1385
  %v1387 = vadd.f32 %v1386, 0.0036580483
  %v1388 = vmul.f32 %v1383, %v1387
  %v1389 = vadd.f32 %v1388, 0.05243302
  %v1390 = vmul.f32 %v1383, %v1389
  %v1391 = vadd.f32 %v1390, 0.18741608
  %v1392 = vmul.f32 %v1383, %v1391
  %v1393 = vadd.f32 %v1392, 1.1283791
  %v1394 = vmul.f32 %v1341, %v1393
  %v1395 = vmul.f32 %v1383, 3.8918573e-05
  %v1396 = vadd.f32 %v1395, 0.001143296
  %v1397 = vmul.f32 %v1383, %v1396
  %v1398 = vadd.f32 %v1397, 0.014752088
  %v1399 = vmul.f32 %v1383, %v1398
  %v1400 = vadd.f32 %v1399, 0.112945676
  %v1401 = vmul.f32 %v1383, %v1400
  %v1402 = vadd.f32 %v1401, 0.4994258
  %v1403 = vmul.f32 %v1383, %v1402
  %v1404 = vadd.f32 %v1403, 1.0
  %v1405 = vrcp.pop %v1404
  %v1406 = vmul.f32 %v1404, %v1405
  %v1407 = vsub.f32 1.0, %v1406
  %v1408 = vmul.f32 %v1405, %v1407
  %v1409 = vadd.f32 %v1405, %v1408
  %vm1410 = vweird.f32 %v1404
  %vm1411 = vweird.f32 %v1405
  %vm1412 = vmor %vm1410, %vm1411
  %v1413 = vsel %vm1412, %v1405, %v1409
  %v1414 = vand.u32 2147483647, %v1404
  %vm1415 = vcmp.eq.f32.partialorder %v1414, 8.507059e+37
  %v1416 = vand.u32 %v1404, 2147483648
  %v1417 = vor.u32 1.1754944e-38, %v1416
  %v1418 = vsel %vm1415, %v1417, %v1413
  %v1419 = vmul.f32 %v1394, %v1418
  %v1420 = vmin.f32 %v1419, 1.0
  %v1421 = vmax.f32 %v1420, -1.0
  %v1422 = vadd.f32 %v1381, 1.0
  %v1423 = vadd.f32 %v1421, 1.0
  %v1424 = vmul.f32 %v1338, %v1422
  %v1425 = vmul.f32 %v1339, %v1423
  %v1426 = vpack.c.bf16 %v1424, %v1424
  %v1427 = vpack.c.bf16 %v1425, %v1425
  %v1428 = vld [vmem:[%s11] sm:$0xf]
  %v1429 = vld [vmem:[%s11 + $0x4] sm:$0xf]
  %v1430 = vld [vmem:[%s11 + $0x8] sm:$0xf]
  %v1431 = vld [vmem:[%s11 + $0xc] sm:$0xf]
  %v1432 = vld [vmem:[%s11 + $0x10] sm:$0xf]
  %v1433 = vld [vmem:[%s11 + $0x14] sm:$0xf]
  %v1434 = vld [vmem:[%s11 + $0x18] sm:$0xf]
  %v1435 = vld [vmem:[%s11 + $0x1c] sm:$0xf]
  %v1436 = vld [vmem:[%s11 + $0x20] sm:$0xf]
  %v1437 = vld [vmem:[%s11 + $0x24] sm:$0xf]
  %v1438 = vld [vmem:[%s11 + $0x28] sm:$0xf]
  %v1439 = vld [vmem:[%s11 + $0x2c] sm:$0xf]
  %v1440 = vld [vmem:[%s11 + $0x30] sm:$0xf]
  %v1441 = vld [vmem:[%s11 + $0x34] sm:$0xf]
  %v1442 = vld [vmem:[%s11 + $0x38] sm:$0xf]
  %v1443 = vld [vmem:[%s11 + $0x3c] sm:$0xf]
  %v1444 = vld [vmem:[%s11 + $0x40] sm:$0xf]
  %v1445 = vld [vmem:[%s11 + $0x44] sm:$0xf]
  %v1446 = vld [vmem:[%s11 + $0x48] sm:$0xf]
  %v1447 = vld [vmem:[%s11 + $0x4c] sm:$0xf]
  %v1448 = vld [vmem:[%s11 + $0x50] sm:$0xf]
  %v1449 = vld [vmem:[%s11 + $0x54] sm:$0xf]
  %v1450 = vld [vmem:[%s11 + $0x58] sm:$0xf]
  %v1451 = vld [vmem:[%s11 + $0x5c] sm:$0xf]
  %v1452 = vld [vmem:[%s11 + $0x60] sm:$0xf]
  %v1453 = vld [vmem:[%s11 + $0x64] sm:$0xf]
  %v1454 = vld [vmem:[%s11 + $0x68] sm:$0xf]
  %v1455 = vld [vmem:[%s11 + $0x6c] sm:$0xf]
  %v1456 = vld [vmem:[%s11 + $0x70] sm:$0xf]
  %v1457 = vld [vmem:[%s11 + $0x74] sm:$0xf]
  %v1458 = vld [vmem:[%s11 + $0x78] sm:$0xf]
  %v1459 = vld [vmem:[%s11 + $0x7c] sm:$0xf]
  %v1460 = vld [vmem:[%s12] sm:$0x1]
  %v1462 = vperm.slane %v1460, 0
  %v1496 = vunpack.c.l.b16 %v1428
  %v1497 = vunpack.c.l.b16 %v1429
  %v1498 = vunpack.c.l.b16 %v1430
  %v1499 = vunpack.c.l.b16 %v1431
  %v1500 = vunpack.c.l.b16 %v1432
  %v1501 = vunpack.c.l.b16 %v1433
  %v1502 = vunpack.c.l.b16 %v1434
  %v1503 = vunpack.c.l.b16 %v1435
  %v1504 = vunpack.c.l.b16 %v1436
  %v1505 = vunpack.c.l.b16 %v1437
  %v1506 = vunpack.c.l.b16 %v1438
  %v1507 = vunpack.c.l.b16 %v1439
  %v1508 = vunpack.c.l.b16 %v1440
  %v1509 = vunpack.c.l.b16 %v1441
  %v1510 = vunpack.c.l.b16 %v1442
  %v1511 = vunpack.c.l.b16 %v1443
  %v1512 = vunpack.c.l.b16 %v1444
  %v1513 = vunpack.c.l.b16 %v1445
  %v1514 = vunpack.c.l.b16 %v1446
  %v1515 = vunpack.c.l.b16 %v1447
  %v1516 = vunpack.c.l.b16 %v1448
  %v1517 = vunpack.c.l.b16 %v1449
  %v1518 = vunpack.c.l.b16 %v1450
  %v1519 = vunpack.c.l.b16 %v1451
  %v1520 = vunpack.c.l.b16 %v1452
  %v1521 = vunpack.c.l.b16 %v1453
  %v1522 = vunpack.c.l.b16 %v1454
  %v1523 = vunpack.c.l.b16 %v1455
  %v1524 = vunpack.c.l.b16 %v1456
  %v1525 = vunpack.c.l.b16 %v1457
  %v1526 = vunpack.c.l.b16 %v1458
  %v1527 = vunpack.c.l.b16 %v1459
  %v1528 = vpack.c.b16 %v1497, %v1496
  %v1529 = vpack.c.b16 %v1499, %v1498
  %v1530 = vpack.c.b16 %v1501, %v1500
  %v1531 = vpack.c.b16 %v1503, %v1502
  %v1532 = vpack.c.b16 %v1505, %v1504
  %v1533 = vpack.c.b16 %v1507, %v1506
  %v1534 = vpack.c.b16 %v1509, %v1508
  %v1535 = vpack.c.b16 %v1511, %v1510
  %v1536 = vpack.c.b16 %v1513, %v1512
  %v1537 = vpack.c.b16 %v1515, %v1514
  %v1538 = vpack.c.b16 %v1517, %v1516
  %v1539 = vpack.c.b16 %v1519, %v1518
  %v1540 = vpack.c.b16 %v1521, %v1520
  %v1541 = vpack.c.b16 %v1523, %v1522
  %v1542 = vpack.c.b16 %v1525, %v1524
  %v1543 = vpack.c.b16 %v1527, %v1526
  %1560 = vmatpush.bf16.msra.mxu0 %v1535
  %1561 = vmatpush.bf16.msra.mxu0 %v1534
  %1562 = vmatpush.bf16.msra.mxu0 %v1533
  %1563 = vmatpush.bf16.msra.mxu0 %v1532
  %1564 = vmatpush.bf16.msra.mxu0 %v1531
  %1565 = vmatpush.bf16.msra.mxu0 %v1530
  %1566 = vmatpush.bf16.msra.mxu0 %v1529
  %1567 = vmatpush.bf16.msra.mxu0 %v1528
  %1568 = vmatmul.bf16.gmra.mxu0 %v1426
  %v1569 = vpop.f32.mrf.mxu0
  %v1570 = vadd.f32 %v1462, %v1569
  %v1571 = vpop.f32.mrf.mxu0
  %1572 = vdwg.mxu0
  %1573 = vmatpush.bf16.msra.mxu0 %v1543
  %1574 = vmatpush.bf16.msra.mxu0 %v1542
  %1575 = vmatpush.bf16.msra.mxu0 %v1541
  %1576 = vmatpush.bf16.msra.mxu0 %v1540
  %1577 = vmatpush.bf16.msra.mxu0 %v1539
  %1578 = vmatpush.bf16.msra.mxu0 %v1538
  %1579 = vmatpush.bf16.msra.mxu0 %v1537
  %1580 = vmatpush.bf16.msra.mxu0 %v1536
  %1581 = vmatmul.bf16.gmra.mxu0 %v1427
  %v1582 = vpop.f32.mrf.mxu0
  %v1583 = vadd.f32 %v1570, %v1582
  %v1584 = vpop.f32.mrf.mxu0
  %1585 = vdwg.mxu0
  %v1586 = vadd.f32 %v1176, %v1583
  %s1587 = scalar_lea.vmem %s13, 8
  %1588 = vst [vmem:[%s1587] sm:$0x1f] %v1586
  // Predicated region
  $region54: #{vit_forward.5} parent=0 // pred_check
    _
  $region55: #{vit_forward.5} parent=0 // pred_check_branch
    %1590 = sbr.rel (0) target = $region57
  $region56: #{vit_forward.5} parent=0 // pred_region
    _
  $region57: #{vit_forward.5} parent=0 // pred_fallthru
    _
  // Predicated region
  $region58: #{vit_forward.5} parent=0 // pred_check
    _
  $region59: #{vit_forward.5} parent=0 // pred_check_branch
    %1592 = sbr.rel (0) target = $region61
  $region60: #{vit_forward.5} parent=0 // pred_region
    _
  $region61: #{vit_forward.5} parent=0 // pred_fallthru
    _

</llo_original>
